<compile_context>
chip_gen: v7x
topology: tpu7x:2x2x1
jax: 0.10.0
libtpu: 0.0.40
codegen_flags: <defaults>
</compile_context>

<pallas_src>
import functools

import jax
import jax.numpy as jnp
from jax import lax
from jax.experimental import pallas as pl
from jax.experimental.pallas import tpu as pltpu


def _vmem():
    return pl.BlockSpec(memory_space=pltpu.MemorySpace.VMEM)


def _round_up(v, m):
    return ((v + m - 1) // m) * m


def _pad2(a, rows, cols):
    return jnp.pad(a, ((0, rows - a.shape[0]), (0, cols - a.shape[1])))


def _log_sigmoid(x):
    # Numerically stable log(sigmoid(x)); exp/log arguments are well behaved.
    return jnp.minimum(x, 0.0) - jnp.log(1.0 + jnp.exp(-jnp.abs(x)))


# ----------------------------------------------------------------------------
# Shared math (used by the Pallas kernel and by the pure-JAX reference).
# All array arguments are already padded to lane multiples of 128; MXU
# operands are bf16, everything else f32.
# ----------------------------------------------------------------------------
def _forward_math(x0, lhat, w1a, w1b, b1, wc2, b2, wc3, b3, wlin, blin, sel,
                  *, n_pos, n_neg, ep_pad, en_pad):
    f32 = jnp.float32
    bf16 = jnp.bfloat16

    # conv1: relu(x0 @ W0 + (L@x0) @ W1 + b1) -- weights kept split, no lane
    # concat copy (F_in < F_out so (L@x)@W1 ordering is kept).
    lx0 = jnp.dot(lhat, x0, preferred_element_type=f32)               # (N,128)
    x = jnp.maximum(
        jnp.dot(x0, w1a, preferred_element_type=f32)
        + jnp.dot(lx0.astype(bf16), w1b, preferred_element_type=f32)
        + b1, 0.0)                                                    # (N,384)

    # conv2 (reassociated): Y = x @ [W0 | W1]; out = Y0 + L @ Y1 + b2
    y2 = jnp.dot(x.astype(bf16), wc2, preferred_element_type=f32)     # (N,256)
    x1 = jnp.maximum(
        y2[:, :128]
        + jnp.dot(lhat, y2[:, 128:].astype(bf16), preferred_element_type=f32)
        + b2, 0.0)                                                    # (N,128)

    # skip branches: H = relu(x0 @ [Wl1 | Wl2] + b)
    hlin = jnp.maximum(jnp.dot(x0, wlin, preferred_element_type=f32) + blin, 0.0)
    x_skip = x1 + hlin[:, :128]
    z = x1 + hlin[:, 128:]

    # conv3 (reassociated, no relu)
    y3 = jnp.dot(x_skip.astype(bf16), wc3, preferred_element_type=f32)
    out3 = (y3[:, :128]
            + jnp.dot(lhat, y3[:, 128:].astype(bf16), preferred_element_type=f32)
            + b3)                                                     # (N,128)

    # link-reconstruction loss: ONE stacked bf16 gather-matmul for all 4 edge
    # endpoint gathers, then sliced and masked (padded rows excluded).
    zall = jnp.dot(sel, z.astype(bf16), preferred_element_type=f32)   # (4E,128)
    zps = zall[0:ep_pad]
    zpd = zall[ep_pad:2 * ep_pad]
    zns = zall[2 * ep_pad:2 * ep_pad + en_pad]
    znd = zall[2 * ep_pad + en_pad:2 * ep_pad + 2 * en_pad]

    pos_logit = jnp.sum(zps * zpd, axis=1, keepdims=True)             # (Ep,1)
    neg_logit = jnp.sum(zns * znd, axis=1, keepdims=True)             # (En,1)
    pos_row = lax.broadcasted_iota(jnp.int32, (ep_pad, 1), 0)
    neg_row = lax.broadcasted_iota(jnp.int32, (en_pad, 1), 0)
    pos_ls = jnp.where(pos_row < n_pos, _log_sigmoid(pos_logit), 0.0)
    neg_ls = jnp.where(neg_row < n_neg, _log_sigmoid(-neg_logit), 0.0)
    pos_loss = -jnp.sum(pos_ls, axis=0, keepdims=True) * (1.0 / n_pos)
    neg_loss = -jnp.sum(neg_ls, axis=0, keepdims=True) * (1.0 / n_neg)
    return out3, pos_loss + neg_loss                                  # (N,128), (1,1)


# ----------------------------------------------------------------------------
# Fused Pallas kernel: whole forward pass in one launch, everything in VMEM.
# ----------------------------------------------------------------------------
def fused_net_kernel(x0_ref, l_ref, w1a_ref, w1b_ref, b1_ref, wc2_ref, b2_ref,
                     wc3_ref, b3_ref, wlin_ref, blin_ref, sel_ref,
                     out_ref, loss_ref, *, n_pos, n_neg, ep_pad, en_pad):
    out3, loss = _forward_math(
        x0_ref[...], l_ref[...],
        w1a_ref[...], w1b_ref[...], b1_ref[...],
        wc2_ref[...], b2_ref[...], wc3_ref[...], b3_ref[...],
        wlin_ref[...], blin_ref[...], sel_ref[...],
        n_pos=n_pos, n_neg=n_neg, ep_pad=ep_pad, en_pad=en_pad)
    out_ref[...] = out3.astype(out_ref.dtype)          # bf16 node output
    # lane-dense (1,128) output tile; wrapper takes [0, 0]
    loss_ref[...] = jnp.broadcast_to(loss, loss_ref.shape).astype(loss_ref.dtype)


# ----------------------------------------------------------------------------
# Operand preparation: pad to lane multiples of 128, concat weight pairs,
# cast MXU operands to bf16, build a single stacked bf16 edge-selector matrix.
# ----------------------------------------------------------------------------
def _prepare_operands(params, x_in, l_hat, pos_src, pos_dst, neg_src, neg_dst):
    n, f_in = x_in.shape
    assert n % 8 == 0, "node count must be a multiple of 8 (sublane)"
    f_in_p = _round_up(f_in, 128)                          # 64  -> 128
    h1_p = _round_up(params["conv1_w0"].shape[1], 128)     # 300 -> 384
    h2_p = _round_up(params["conv2_w0"].shape[1], 128)     # 100 -> 128
    out_p = 128                                            # 1   -> 128
    assert h2_p == 128 and out_p == 128

    f32, bf16 = jnp.float32, jnp.bfloat16

    x0p = _pad2(x_in, n, f_in_p).astype(bf16)
    l_b = l_hat.astype(bf16)

    # conv1 weights kept split (two K=128 dots in the kernel)
    w1a = _pad2(params["conv1_w0"], f_in_p, h1_p).astype(bf16)
    w1b = _pad2(params["conv1_w1"], f_in_p, h1_p).astype(bf16)
    b1 = _pad2(params["conv1_b"], 1, h1_p).astype(f32)

    # conv2: [W0 | W1]  (h1_p, 2*h2_p)
    wc2 = jnp.concatenate(
        [_pad2(params["conv2_w0"], h1_p, h2_p),
         _pad2(params["conv2_w1"], h1_p, h2_p)], axis=1).astype(bf16)
    b2 = _pad2(params["conv2_b"], 1, h2_p).astype(f32)

    # conv3: [W0 | W1]  (h2_p, 2*out_p)
    wc3 = jnp.concatenate(
        [_pad2(params["conv3_w0"], h2_p, out_p),
         _pad2(params["conv3_w1"], h2_p, out_p)], axis=1).astype(bf16)
    b3 = _pad2(params["conv3_b"], 1, out_p).astype(f32)

    # linears: [Wl1 | Wl2]  (f_in_p, 2*h2_p)
    wlin = jnp.concatenate(
        [_pad2(params["lin1_w"], f_in_p, h2_p),
         _pad2(params["lin2_w"], f_in_p, h2_p)], axis=1).astype(bf16)
    blin = jnp.concatenate(
        [_pad2(params["lin1_b"], 1, h2_p),
         _pad2(params["lin2_b"], 1, h2_p)], axis=1).astype(f32)

    # Stacked bf16 one-hot edge selectors (0/1 exact in bf16); gather == S @ z
    # on the MXU.  Padded rows are all-zero and masked out of the loss.
    n_pos = int(pos_src.shape[0])
    n_neg = int(neg_src.shape[0])
    ep_pad = _round_up(n_pos, 8)
    en_pad = _round_up(n_neg, 8)

    def onehot(idx, rows_pad):
        s = jax.nn.one_hot(idx, n, dtype=bf16)
        return jnp.pad(s, ((0, rows_pad - s.shape[0]), (0, 0)))

    sel = jnp.concatenate(
        [onehot(pos_src, ep_pad), onehot(pos_dst, ep_pad),
         onehot(neg_src, en_pad), onehot(neg_dst, en_pad)], axis=0)

    ops = (x0p, l_b, w1a, w1b, b1, wc2, b2, wc3, b3, wlin, blin, sel)
    meta = dict(n_pos=n_pos, n_neg=n_neg, ep_pad=ep_pad, en_pad=en_pad)
    return ops, meta


# ----------------------------------------------------------------------------
# Full forward pass (eval mode): one Pallas launch.
# ----------------------------------------------------------------------------
def net_forward(params, x_in, l_hat, pos_src, pos_dst, neg_src, neg_dst):
    n = x_in.shape[0]
    ops, meta = _prepare_operands(
        params, x_in, l_hat, pos_src, pos_dst, neg_src, neg_dst)
    kern = functools.partial(fused_net_kernel, **meta)
    out_pad, loss_row = pl.pallas_call(
        kern,
        out_shape=(jax.ShapeDtypeStruct((n, 128), jnp.bfloat16),
                   jax.ShapeDtypeStruct((1, 128), jnp.float32)),
        in_specs=[_vmem()] * len(ops),
        out_specs=(_vmem(), _vmem()),
    )(*ops)
    return (out_pad[:, :1].astype(jnp.float32), loss_row[0, 0],
            params["c1"], params["c2"])


def net_forward_reference(params, x_in, l_hat, pos_src, pos_dst, neg_src, neg_dst):
    """Pure-JAX reference over the identical padded/bf16 operands."""
    ops, meta = _prepare_operands(
        params, x_in, l_hat, pos_src, pos_dst, neg_src, neg_dst)
    out3, loss = _forward_math(*ops, **meta)
    out = out3[:, :1].astype(jnp.bfloat16).astype(jnp.float32)
    return out, loss[0, 0], params["c1"], params["c2"]


# ----------------------------------------------------------------------------
# Deterministic parameter / graph construction.
# ----------------------------------------------------------------------------
def init_params(key):
    def glorot(k, shape):
        fan_in, fan_out = shape[0], shape[1]
        lim = (6.0 / (fan_in + fan_out)) ** 0.5
        return jax.random.uniform(k, shape, jnp.float32, -lim, lim)

    keys = jax.random.split(key, 10)
    return {
        # ChebConv(64 -> 300, K=2): weights stored (in, out); bias as (1, out).
        "conv1_w0": glorot(keys[0], (64, 300)),
        "conv1_w1": glorot(keys[1], (64, 300)),
        "conv1_b": jnp.zeros((1, 300), jnp.float32),
        # ChebConv(300 -> 100, K=2)
        "conv2_w0": glorot(keys[2], (300, 100)),
        "conv2_w1": glorot(keys[3], (300, 100)),
        "conv2_b": jnp.zeros((1, 100), jnp.float32),
        # ChebConv(100 -> 1, K=2)
        "conv3_w0": glorot(keys[4], (100, 1)),
        "conv3_w1": glorot(keys[5], (100, 1)),
        "conv3_b": jnp.zeros((1, 1), jnp.float32),
        # Linear(64 -> 100) x2 (stored transposed: (in, out))
        "lin1_w": glorot(keys[6], (64, 100)),
        "lin1_b": jnp.zeros((1, 100), jnp.float32),
        "lin2_w": glorot(keys[7], (64, 100)),
        "lin2_b": jnp.zeros((1, 100), jnp.float32),
        "c1": jnp.array([0.5], jnp.float32),
        "c2": jnp.array([0.5], jnp.float32),
    }


def build_graph(n_nodes):
    # Undirected ring graph -> dense adjacency, sym-normalized ChebConv operator.
    i = jnp.arange(n_nodes)
    src = jnp.concatenate([i, (i + 1) % n_nodes])
    dst = jnp.concatenate([(i + 1) % n_nodes, i])
    adj = jnp.zeros((n_nodes, n_nodes), jnp.float32).at[src, dst].set(1.0)
    deg = adj.sum(axis=1)
    dinv = jnp.where(deg > 0, 1.0 / jnp.sqrt(jnp.maximum(deg, 1.0)), 0.0)
    a_norm = dinv[:, None] * adj * dinv[None, :]
    l_hat = -a_norm  # (2/lambda_max) * L_sym - I  with lambda_max = 2
    return l_hat, src, dst


if __name__ == "__main__":
    N = 64          # number of graph nodes
    F_IN = 64       # ChebConv / Linear input feature dim (fixed by module)
    N_NEG = 128     # number of negative-sampled edges

    key = jax.random.PRNGKey(0)
    k_feat, k_param, k_neg0, k_neg1 = jax.random.split(key, 4)

    x_in = jax.random.normal(k_feat, (N, F_IN), jnp.float32)
    params = init_params(k_param)
    l_hat, pos_src, pos_dst = build_graph(N)

    neg_src = jax.random.randint(k_neg0, (N_NEG,), 0, N)
    neg_dst = jax.random.randint(k_neg1, (N_NEG,), 0, N)

    fwd = jax.jit(net_forward)
    out, r_loss, c1, c2 = fwd(params, x_in, l_hat,
                              pos_src, pos_dst, neg_src, neg_dst)
    jax.block_until_ready((out, r_loss, c1, c2))

    # Pure-JAX reference using the exact same padded / bf16 operands.
    ref_out, ref_loss, _, _ = jax.jit(net_forward_reference)(
        params, x_in, l_hat, pos_src, pos_dst, neg_src, neg_dst)
    jax.block_until_ready((ref_out, ref_loss))

    assert out.shape == (N, 1)
    assert r_loss.shape == ()
    assert bool(jnp.all(jnp.isfinite(out)))
    assert bool(jnp.isfinite(r_loss))
    assert bool(jnp.allclose(out, ref_out, rtol=1e-2, atol=1e-2))
    assert abs(float(r_loss) - float(ref_loss)) <= 1e-2 * max(1.0, abs(float(ref_loss)))
    print("KERNEL_OK")
</pallas_src>

<mosaic_0001>
module attributes {stable_mosaic.version = 11 : i64} {
  func.func @fused_net_kernel(%arg0: memref<64x128xbf16, #tpu.memory_space<vmem>>, %arg1: memref<64x64xbf16, #tpu.memory_space<vmem>>, %arg2: memref<128x384xbf16, #tpu.memory_space<vmem>>, %arg3: memref<128x384xbf16, #tpu.memory_space<vmem>>, %arg4: memref<1x384xf32, #tpu.memory_space<vmem>>, %arg5: memref<384x256xbf16, #tpu.memory_space<vmem>>, %arg6: memref<1x128xf32, #tpu.memory_space<vmem>>, %arg7: memref<128x256xbf16, #tpu.memory_space<vmem>>, %arg8: memref<1x128xf32, #tpu.memory_space<vmem>>, %arg9: memref<128x256xbf16, #tpu.memory_space<vmem>>, %arg10: memref<1x256xf32, #tpu.memory_space<vmem>>, %arg11: memref<512x64xbf16, #tpu.memory_space<vmem>>, %arg12: memref<64x128xbf16, #tpu.memory_space<vmem>>, %arg13: memref<1x128xf32, #tpu.memory_space<vmem>>) attributes {dimension_semantics = [], scalar_prefetch = 0 : i64, scratch_operands = 0 : i64, tpu.core_type = #tpu.core_type<tc>} {
    %c0 = arith.constant 0 : index
    %c0_0 = arith.constant 0 : index
    %0 = vector.load %arg0[%c0, %c0_0] : memref<64x128xbf16, #tpu.memory_space<vmem>>, vector<64x128xbf16>
    %c0_1 = arith.constant 0 : index
    %c0_2 = arith.constant 0 : index
    %1 = vector.load %arg1[%c0_1, %c0_2] : memref<64x64xbf16, #tpu.memory_space<vmem>>, vector<64x64xbf16>
    %c0_3 = arith.constant 0 : index
    %c0_4 = arith.constant 0 : index
    %2 = vector.load %arg2[%c0_3, %c0_4] : memref<128x384xbf16, #tpu.memory_space<vmem>>, vector<128x384xbf16>
    %c0_5 = arith.constant 0 : index
    %c0_6 = arith.constant 0 : index
    %3 = vector.load %arg3[%c0_5, %c0_6] : memref<128x384xbf16, #tpu.memory_space<vmem>>, vector<128x384xbf16>
    %c0_7 = arith.constant 0 : index
    %c0_8 = arith.constant 0 : index
    %4 = vector.load %arg4[%c0_7, %c0_8] : memref<1x384xf32, #tpu.memory_space<vmem>>, vector<1x384xf32>
    %c0_9 = arith.constant 0 : index
    %c0_10 = arith.constant 0 : index
    %5 = vector.load %arg5[%c0_9, %c0_10] : memref<384x256xbf16, #tpu.memory_space<vmem>>, vector<384x256xbf16>
    %c0_11 = arith.constant 0 : index
    %c0_12 = arith.constant 0 : index
    %6 = vector.load %arg6[%c0_11, %c0_12] : memref<1x128xf32, #tpu.memory_space<vmem>>, vector<1x128xf32>
    %c0_13 = arith.constant 0 : index
    %c0_14 = arith.constant 0 : index
    %7 = vector.load %arg7[%c0_13, %c0_14] : memref<128x256xbf16, #tpu.memory_space<vmem>>, vector<128x256xbf16>
    %c0_15 = arith.constant 0 : index
    %c0_16 = arith.constant 0 : index
    %8 = vector.load %arg8[%c0_15, %c0_16] : memref<1x128xf32, #tpu.memory_space<vmem>>, vector<1x128xf32>
    %c0_17 = arith.constant 0 : index
    %c0_18 = arith.constant 0 : index
    %9 = vector.load %arg9[%c0_17, %c0_18] : memref<128x256xbf16, #tpu.memory_space<vmem>>, vector<128x256xbf16>
    %c0_19 = arith.constant 0 : index
    %c0_20 = arith.constant 0 : index
    %10 = vector.load %arg10[%c0_19, %c0_20] : memref<1x256xf32, #tpu.memory_space<vmem>>, vector<1x256xf32>
    %c0_21 = arith.constant 0 : index
    %c0_22 = arith.constant 0 : index
    %11 = vector.load %arg11[%c0_21, %c0_22] : memref<512x64xbf16, #tpu.memory_space<vmem>>, vector<512x64xbf16>
    %cst = arith.constant dense<0.000000e+00> : vector<64x128xf32>
    %12 = tpu.matmul %1, %0, %cst {dimension_numbers = #tpu.dot_dimension_numbers<[1], [0], [0], [1], [0, 0, 1, 1], [], []>} : vector<64x64xbf16>, vector<64x128xbf16>, vector<64x128xf32> -> vector<64x128xf32>
    %cst_23 = arith.constant dense<0.000000e+00> : vector<64x384xf32>
    %13 = tpu.matmul %0, %2, %cst_23 {dimension_numbers = #tpu.dot_dimension_numbers<[1], [0], [0], [1], [0, 0, 1, 1], [], []>} : vector<64x128xbf16>, vector<128x384xbf16>, vector<64x384xf32> -> vector<64x384xf32>
    %14 = arith.truncf %12 : vector<64x128xf32> to vector<64x128xbf16>
    %cst_24 = arith.constant dense<0.000000e+00> : vector<64x384xf32>
    %15 = tpu.matmul %14, %3, %cst_24 {dimension_numbers = #tpu.dot_dimension_numbers<[1], [0], [0], [1], [0, 0, 1, 1], [], []>} : vector<64x128xbf16>, vector<128x384xbf16>, vector<64x384xf32> -> vector<64x384xf32>
    %16 = arith.addf %13, %15 : vector<64x384xf32>
    %17 = vector.broadcast %4 : vector<1x384xf32> to vector<64x384xf32>
    %18 = arith.addf %16, %17 : vector<64x384xf32>
    %cst_25 = arith.constant 0.000000e+00 : f32
    %19 = vector.broadcast %cst_25 : f32 to vector<64x384xf32>
    %20 = arith.maximumf %18, %19 : vector<64x384xf32>
    %21 = arith.truncf %20 : vector<64x384xf32> to vector<64x384xbf16>
    %cst_26 = arith.constant dense<0.000000e+00> : vector<64x256xf32>
    %22 = tpu.matmul %21, %5, %cst_26 {dimension_numbers = #tpu.dot_dimension_numbers<[1], [0], [0], [1], [0, 0, 1, 1], [], []>} : vector<64x384xbf16>, vector<384x256xbf16>, vector<64x256xf32> -> vector<64x256xf32>
    %23 = vector.extract_strided_slice %22 {offsets = [0, 0], sizes = [64, 128], strides = [1, 1]} : vector<64x256xf32> to vector<64x128xf32>
    %24 = vector.extract_strided_slice %22 {offsets = [0, 128], sizes = [64, 128], strides = [1, 1]} : vector<64x256xf32> to vector<64x128xf32>
    %25 = arith.truncf %24 : vector<64x128xf32> to vector<64x128xbf16>
    %cst_27 = arith.constant dense<0.000000e+00> : vector<64x128xf32>
    %26 = tpu.matmul %1, %25, %cst_27 {dimension_numbers = #tpu.dot_dimension_numbers<[1], [0], [0], [1], [0, 0, 1, 1], [], []>} : vector<64x64xbf16>, vector<64x128xbf16>, vector<64x128xf32> -> vector<64x128xf32>
    %27 = arith.addf %23, %26 : vector<64x128xf32>
    %28 = vector.broadcast %6 : vector<1x128xf32> to vector<64x128xf32>
    %29 = arith.addf %27, %28 : vector<64x128xf32>
    %cst_28 = arith.constant 0.000000e+00 : f32
    %30 = vector.broadcast %cst_28 : f32 to vector<64x128xf32>
    %31 = arith.maximumf %29, %30 : vector<64x128xf32>
    %cst_29 = arith.constant dense<0.000000e+00> : vector<64x256xf32>
    %32 = tpu.matmul %0, %9, %cst_29 {dimension_numbers = #tpu.dot_dimension_numbers<[1], [0], [0], [1], [0, 0, 1, 1], [], []>} : vector<64x128xbf16>, vector<128x256xbf16>, vector<64x256xf32> -> vector<64x256xf32>
    %33 = vector.broadcast %10 : vector<1x256xf32> to vector<64x256xf32>
    %34 = arith.addf %32, %33 : vector<64x256xf32>
    %cst_30 = arith.constant 0.000000e+00 : f32
    %35 = vector.broadcast %cst_30 : f32 to vector<64x256xf32>
    %36 = arith.maximumf %34, %35 : vector<64x256xf32>
    %37 = vector.extract_strided_slice %36 {offsets = [0, 0], sizes = [64, 128], strides = [1, 1]} : vector<64x256xf32> to vector<64x128xf32>
    %38 = arith.addf %31, %37 : vector<64x128xf32>
    %39 = vector.extract_strided_slice %36 {offsets = [0, 128], sizes = [64, 128], strides = [1, 1]} : vector<64x256xf32> to vector<64x128xf32>
    %40 = arith.addf %31, %39 : vector<64x128xf32>
    %41 = arith.truncf %38 : vector<64x128xf32> to vector<64x128xbf16>
    %cst_31 = arith.constant dense<0.000000e+00> : vector<64x256xf32>
    %42 = tpu.matmul %41, %7, %cst_31 {dimension_numbers = #tpu.dot_dimension_numbers<[1], [0], [0], [1], [0, 0, 1, 1], [], []>} : vector<64x128xbf16>, vector<128x256xbf16>, vector<64x256xf32> -> vector<64x256xf32>
    %43 = vector.extract_strided_slice %42 {offsets = [0, 0], sizes = [64, 128], strides = [1, 1]} : vector<64x256xf32> to vector<64x128xf32>
    %44 = vector.extract_strided_slice %42 {offsets = [0, 128], sizes = [64, 128], strides = [1, 1]} : vector<64x256xf32> to vector<64x128xf32>
    %45 = arith.truncf %44 : vector<64x128xf32> to vector<64x128xbf16>
    %cst_32 = arith.constant dense<0.000000e+00> : vector<64x128xf32>
    %46 = tpu.matmul %1, %45, %cst_32 {dimension_numbers = #tpu.dot_dimension_numbers<[1], [0], [0], [1], [0, 0, 1, 1], [], []>} : vector<64x64xbf16>, vector<64x128xbf16>, vector<64x128xf32> -> vector<64x128xf32>
    %47 = arith.addf %43, %46 : vector<64x128xf32>
    %48 = vector.broadcast %8 : vector<1x128xf32> to vector<64x128xf32>
    %49 = arith.addf %47, %48 : vector<64x128xf32>
    %50 = arith.truncf %40 : vector<64x128xf32> to vector<64x128xbf16>
    %cst_33 = arith.constant dense<0.000000e+00> : vector<512x128xf32>
    %51 = tpu.matmul %11, %50, %cst_33 {dimension_numbers = #tpu.dot_dimension_numbers<[1], [0], [0], [1], [0, 0, 1, 1], [], []>} : vector<512x64xbf16>, vector<64x128xbf16>, vector<512x128xf32> -> vector<512x128xf32>
    %52 = vector.extract_strided_slice %51 {offsets = [0, 0], sizes = [128, 128], strides = [1, 1]} : vector<512x128xf32> to vector<128x128xf32>
    %53 = vector.extract_strided_slice %51 {offsets = [128, 0], sizes = [128, 128], strides = [1, 1]} : vector<512x128xf32> to vector<128x128xf32>
    %54 = vector.extract_strided_slice %51 {offsets = [256, 0], sizes = [128, 128], strides = [1, 1]} : vector<512x128xf32> to vector<128x128xf32>
    %55 = vector.extract_strided_slice %51 {offsets = [384, 0], sizes = [128, 128], strides = [1, 1]} : vector<512x128xf32> to vector<128x128xf32>
    %56 = arith.mulf %52, %53 : vector<128x128xf32>
    %cst_34 = arith.constant dense<0.000000e+00> : vector<128xf32>
    %57 = vector.multi_reduction <add>, %56, %cst_34 [1] : vector<128x128xf32> to vector<128xf32>
    %58 = vector.shape_cast %57 : vector<128xf32> to vector<128x1xf32>
    %59 = arith.mulf %54, %55 : vector<128x128xf32>
    %cst_35 = arith.constant dense<0.000000e+00> : vector<128xf32>
    %60 = vector.multi_reduction <add>, %59, %cst_35 [1] : vector<128x128xf32> to vector<128xf32>
    %61 = vector.shape_cast %60 : vector<128xf32> to vector<128x1xf32>
    %62 = tpu.iota {dimensions = array<i32: 0>} : vector<128x1xi32>
    %63 = tpu.iota {dimensions = array<i32: 0>} : vector<128x1xi32>
    %c128_i32 = arith.constant 128 : i32
    %64 = vector.broadcast %c128_i32 : i32 to vector<128x1xi32>
    %65 = arith.cmpi slt, %62, %64 : vector<128x1xi32>
    %cst_36 = arith.constant 0.000000e+00 : f32
    %66 = vector.broadcast %cst_36 : f32 to vector<128x1xf32>
    %67 = arith.minimumf %58, %66 : vector<128x1xf32>
    %68 = math.absf %58 : vector<128x1xf32>
    %cst_37 = arith.constant 0.000000e+00 : f32
    %69 = vector.broadcast %cst_37 : f32 to vector<128x1xf32>
    %70 = arith.subf %69, %68 : vector<128x1xf32>
    %71 = math.exp %70 : vector<128x1xf32>
    %cst_38 = arith.constant 1.000000e+00 : f32
    %72 = vector.broadcast %cst_38 : f32 to vector<128x1xf32>
    %73 = arith.addf %72, %71 : vector<128x1xf32>
    %74 = math.log %73 : vector<128x1xf32>
    %75 = arith.subf %67, %74 : vector<128x1xf32>
    %cst_39 = arith.constant 0.000000e+00 : f32
    %76 = vector.broadcast %cst_39 : f32 to vector<128x1xf32>
    %77 = arith.select %65, %75, %76 : vector<128x1xi1>, vector<128x1xf32>
    %c128_i32_40 = arith.constant 128 : i32
    %78 = vector.broadcast %c128_i32_40 : i32 to vector<128x1xi32>
    %79 = arith.cmpi slt, %63, %78 : vector<128x1xi32>
    %cst_41 = arith.constant 0.000000e+00 : f32
    %80 = vector.broadcast %cst_41 : f32 to vector<128x1xf32>
    %81 = arith.subf %80, %61 : vector<128x1xf32>
    %cst_42 = arith.constant 0.000000e+00 : f32
    %82 = vector.broadcast %cst_42 : f32 to vector<128x1xf32>
    %83 = arith.minimumf %81, %82 : vector<128x1xf32>
    %84 = math.absf %81 : vector<128x1xf32>
    %cst_43 = arith.constant 0.000000e+00 : f32
    %85 = vector.broadcast %cst_43 : f32 to vector<128x1xf32>
    %86 = arith.subf %85, %84 : vector<128x1xf32>
    %87 = math.exp %86 : vector<128x1xf32>
    %cst_44 = arith.constant 1.000000e+00 : f32
    %88 = vector.broadcast %cst_44 : f32 to vector<128x1xf32>
    %89 = arith.addf %88, %87 : vector<128x1xf32>
    %90 = math.log %89 : vector<128x1xf32>
    %91 = arith.subf %83, %90 : vector<128x1xf32>
    %cst_45 = arith.constant 0.000000e+00 : f32
    %92 = vector.broadcast %cst_45 : f32 to vector<128x1xf32>
    %93 = arith.select %79, %91, %92 : vector<128x1xi1>, vector<128x1xf32>
    %cst_46 = arith.constant dense<0.000000e+00> : vector<1xf32>
    %94 = vector.multi_reduction <add>, %77, %cst_46 [0] : vector<128x1xf32> to vector<1xf32>
    %95 = vector.shape_cast %94 : vector<1xf32> to vector<1x1xf32>
    %cst_47 = arith.constant 0.000000e+00 : f32
    %96 = vector.broadcast %cst_47 : f32 to vector<1x1xf32>
    %97 = arith.subf %96, %95 : vector<1x1xf32>
    %cst_48 = arith.constant 7.812500e-03 : f32
    %98 = vector.broadcast %cst_48 : f32 to vector<1x1xf32>
    %99 = arith.mulf %97, %98 : vector<1x1xf32>
    %cst_49 = arith.constant dense<0.000000e+00> : vector<1xf32>
    %100 = vector.multi_reduction <add>, %93, %cst_49 [0] : vector<128x1xf32> to vector<1xf32>
    %101 = vector.shape_cast %100 : vector<1xf32> to vector<1x1xf32>
    %cst_50 = arith.constant 0.000000e+00 : f32
    %102 = vector.broadcast %cst_50 : f32 to vector<1x1xf32>
    %103 = arith.subf %102, %101 : vector<1x1xf32>
    %cst_51 = arith.constant 7.812500e-03 : f32
    %104 = vector.broadcast %cst_51 : f32 to vector<1x1xf32>
    %105 = arith.mulf %103, %104 : vector<1x1xf32>
    %106 = arith.addf %99, %105 : vector<1x1xf32>
    %107 = arith.truncf %49 : vector<64x128xf32> to vector<64x128xbf16>
    %c0_52 = arith.constant 0 : index
    %c0_53 = arith.constant 0 : index
    %108 = vector.load %arg12[%c0_52, %c0_53] : memref<64x128xbf16, #tpu.memory_space<vmem>>, vector<64x128xbf16>
    tpu.vector_store %arg12[%c0_52, %c0_53], %107 {strides = array<i32>} : memref<64x128xbf16, #tpu.memory_space<vmem>>, vector<64x128xbf16>,
    %109 = vector.shape_cast %106 : vector<1x1xf32> to vector<1x1xf32>
    %110 = vector.broadcast %109 : vector<1x1xf32> to vector<1x128xf32>
    %c0_54 = arith.constant 0 : index
    %c0_55 = arith.constant 0 : index
    %111 = vector.load %arg13[%c0_54, %c0_55] : memref<1x128xf32, #tpu.memory_space<vmem>>, vector<1x128xf32>
    tpu.vector_store %arg13[%c0_54, %c0_55], %110 {strides = array<i32>} : memref<1x128xf32, #tpu.memory_space<vmem>>, vector<1x128xf32>,
    return
  }
}

</mosaic_0001>

<llo_original>
// kernel: net_forward.1
$region0: #{net_forward.1}
  #allocation0 [shape = 'u32[]', space=smem, size = 0x4, offset = 0x4, fixed_abs, tag = 'smem constant byte address 0x4 - core index']
  #allocation1 [shape = 'u32[144,128]{1,0:T(1,128)}', space=vmem, size = 0x12000, scoped, tag = 'internal scratch']
  %s0 = inlined_call_operand.vmem [shape: bf16[64,128], index: 0, kind: input, shape index: {}]
  %s1 = inlined_call_operand.vmem [shape: bf16[64,64], index: 1, kind: input, shape index: {}]
  %s2 = inlined_call_operand.vmem [shape: bf16[128,384], index: 2, kind: input, shape index: {}]
  %s3 = inlined_call_operand.vmem [shape: bf16[128,384], index: 3, kind: input, shape index: {}]
  %s4 = inlined_call_operand.vmem [shape: f32[1,384], index: 4, kind: input, shape index: {}]
  %s5 = inlined_call_operand.vmem [shape: bf16[384,256], index: 5, kind: input, shape index: {}]
  %s6 = inlined_call_operand.vmem [shape: f32[1,128], index: 6, kind: input, shape index: {}]
  %s7 = inlined_call_operand.vmem [shape: bf16[128,256], index: 7, kind: input, shape index: {}]
  %s8 = inlined_call_operand.vmem [shape: f32[1,128], index: 8, kind: input, shape index: {}]
  %s9 = inlined_call_operand.vmem [shape: bf16[128,256], index: 9, kind: input, shape index: {}]
  %s10 = inlined_call_operand.vmem [shape: f32[1,256], index: 10, kind: input, shape index: {}]
  %s11 = inlined_call_operand.vmem [shape: bf16[512,64], index: 11, kind: input, shape index: {}]
  %s12 = inlined_call_operand.vmem [shape: bf16[64,128], index: 12, kind: output, shape index: {0}]
  %s13 = inlined_call_operand.hbm [shape: f32[1,128], index: 13, kind: output, shape index: {1}]
  %14 = xla_tuple %s12, %s13
  %s15 = sld [smem:[#allocation0]]
  $region66: #{net_forward.1} parent=0
    _
  %s17 = ssub.s32 1, %s15
  %s18 = scalar_select 0, %s17, %s15
  $region1: #{net_forward.1} parent=0
    #allocation2 [shape = 'u8[512]{0}', space=vmem, size = 0x400, scoped, tag = 'output window, operand 1, single buffered']
    #allocation3 [shape = 's32[1]{0}', space=sflag, size = 0x4, scoped, tag = 'scoped memory for net_forward.1']
    %19 = vsyncpa [#allocation3], 0
    // Predicated region
    $region2: #{net_forward.1} parent=1 // pred_check
      _
    $region3: #{net_forward.1} parent=1 // pred_check_branch
      %21 = sbr.rel (0) target = $region5
    $region4: #{net_forward.1} parent=1 // pred_region
      _
    $region5: #{net_forward.1} parent=1 // pred_fallthru
      _
    // Predicated region
    $region6: #{net_forward.1} parent=1 // pred_check
      _
    $region7: #{net_forward.1} parent=1 // pred_check_branch
      %23 = sbr.rel (0) target = $region9
    $region8: #{net_forward.1} parent=1 // pred_region
      _
    $region9: #{net_forward.1} parent=1 // pred_fallthru
      _
    // Predicated region
    $region10: #{net_forward.1} parent=1 // pred_check
      _
    $region11: #{net_forward.1} parent=1 // pred_check_branch
      %25 = sbr.rel (0) target = $region13
    $region12: #{net_forward.1} parent=1 // pred_region
      _
    $region13: #{net_forward.1} parent=1 // pred_fallthru
      _
    // Predicated region
    $region14: #{net_forward.1} parent=1 // pred_check
      _
    $region15: #{net_forward.1} parent=1 // pred_check_branch
      %27 = sbr.rel (0) target = $region17
    $region16: #{net_forward.1} parent=1 // pred_region
      _
    $region17: #{net_forward.1} parent=1 // pred_fallthru
      _
    // Predicated region
    $region18: #{net_forward.1} parent=1 // pred_check
      _
    $region19: #{net_forward.1} parent=1 // pred_check_branch
      %29 = sbr.rel (0) target = $region21
    $region20: #{net_forward.1} parent=1 // pred_region
      _
    $region21: #{net_forward.1} parent=1 // pred_fallthru
      _
    // Predicated region
    $region22: #{net_forward.1} parent=1 // pred_check
      _
    $region23: #{net_forward.1} parent=1 // pred_check_branch
      %31 = sbr.rel (0) target = $region25
    $region24: #{net_forward.1} parent=1 // pred_region
      _
    $region25: #{net_forward.1} parent=1 // pred_fallthru
      _
    // Predicated region
    $region26: #{net_forward.1} parent=1 // pred_check
      _
    $region27: #{net_forward.1} parent=1 // pred_check_branch
      %33 = sbr.rel (0) target = $region29
    $region28: #{net_forward.1} parent=1 // pred_region
      _
    $region29: #{net_forward.1} parent=1 // pred_fallthru
      _
    // Predicated region
    $region30: #{net_forward.1} parent=1 // pred_check
      _
    $region31: #{net_forward.1} parent=1 // pred_check_branch
      %35 = sbr.rel (0) target = $region33
    $region32: #{net_forward.1} parent=1 // pred_region
      _
    $region33: #{net_forward.1} parent=1 // pred_fallthru
      _
    // Predicated region
    $region34: #{net_forward.1} parent=1 // pred_check
      _
    $region35: #{net_forward.1} parent=1 // pred_check_branch
      %37 = sbr.rel (0) target = $region37
    $region36: #{net_forward.1} parent=1 // pred_region
      _
    $region37: #{net_forward.1} parent=1 // pred_fallthru
      _
    // Predicated region
    $region38: #{net_forward.1} parent=1 // pred_check
      _
    $region39: #{net_forward.1} parent=1 // pred_check_branch
      %39 = sbr.rel (0) target = $region41
    $region40: #{net_forward.1} parent=1 // pred_region
      _
    $region41: #{net_forward.1} parent=1 // pred_fallthru
      _
    // Predicated region
    $region42: #{net_forward.1} parent=1 // pred_check
      _
    $region43: #{net_forward.1} parent=1 // pred_check_branch
      %41 = sbr.rel (0) target = $region45
    $region44: #{net_forward.1} parent=1 // pred_region
      _
    $region45: #{net_forward.1} parent=1 // pred_fallthru
      _
    // Predicated region
    $region46: #{net_forward.1} parent=1 // pred_check
      _
    $region47: #{net_forward.1} parent=1 // pred_check_branch
      %43 = sbr.rel (0) target = $region49
    $region48: #{net_forward.1} parent=1 // pred_region
      _
    $region49: #{net_forward.1} parent=1 // pred_fallthru
      _
    %v45 = vld [vmem:[%s0] sm:$0xf]
    %v46 = vld [vmem:[%s0 + $0x4] sm:$0xf]
    %v47 = vld [vmem:[%s0 + $0x8] sm:$0xf]
    %v48 = vld [vmem:[%s0 + $0xc] sm:$0xf]
    %v49 = vld [vmem:[%s0 + $0x10] sm:$0xf]
    %v50 = vld [vmem:[%s0 + $0x14] sm:$0xf]
    %v51 = vld [vmem:[%s0 + $0x18] sm:$0xf]
    %v52 = vld [vmem:[%s0 + $0x1c] sm:$0xf]
    %v53 = vld [vmem:[%s1] sm:$0xf]
    %v54 = vld [vmem:[%s1 + $0x4] sm:$0xf]
    %v55 = vld [vmem:[%s1 + $0x8] sm:$0xf]
    %v56 = vld [vmem:[%s1 + $0xc] sm:$0xf]
    %v57 = vld [vmem:[%s1 + $0x10] sm:$0xf]
    %v58 = vld [vmem:[%s1 + $0x14] sm:$0xf]
    %v59 = vld [vmem:[%s1 + $0x18] sm:$0xf]
    %v60 = vld [vmem:[%s1 + $0x1c] sm:$0xf]
    %v61 = vld [vmem:[%s2] sm:$0xff]
    %v62 = vld [vmem:[%s2 + $0x8] sm:$0xf]
    %v63 = vld [vmem:[%s2 + $0xc] sm:$0xff]
    %v64 = vld [vmem:[%s2 + $0x14] sm:$0xf]
    %v65 = vld [vmem:[%s2 + $0x18] sm:$0xff]
    %v66 = vld [vmem:[%s2 + $0x20] sm:$0xf]
    %v67 = vld [vmem:[%s2 + $0x24] sm:$0xff]
    %v68 = vld [vmem:[%s2 + $0x2c] sm:$0xf]
    %v69 = vld [vmem:[%s2 + $0x30] sm:$0xff]
    %v70 = vld [vmem:[%s2 + $0x38] sm:$0xf]
    %v71 = vld [vmem:[%s2 + $0x3c] sm:$0xff]
    %v72 = vld [vmem:[%s2 + $0x44] sm:$0xf]
    %v73 = vld [vmem:[%s2 + $0x48] sm:$0xff]
    %v74 = vld [vmem:[%s2 + $0x50] sm:$0xf]
    %v75 = vld [vmem:[%s2 + $0x54] sm:$0xff]
    %v76 = vld [vmem:[%s2 + $0x5c] sm:$0xf]
    %v77 = vld [vmem:[%s2 + $0x60] sm:$0xff]
    %v78 = vld [vmem:[%s2 + $0x68] sm:$0xf]
    %v79 = vld [vmem:[%s2 + $0x6c] sm:$0xff]
    %v80 = vld [vmem:[%s2 + $0x74] sm:$0xf]
    %v81 = vld [vmem:[%s2 + $0x78] sm:$0xff]
    %v82 = vld [vmem:[%s2 + $0x80] sm:$0xf]
    %v83 = vld [vmem:[%s2 + $0x84] sm:$0xff]
    %v84 = vld [vmem:[%s2 + $0x8c] sm:$0xf]
    %v85 = vld [vmem:[%s2 + $0x90] sm:$0xff]
    %v86 = vld [vmem:[%s2 + $0x98] sm:$0xf]
    %v87 = vld [vmem:[%s2 + $0x9c] sm:$0xff]
    %v88 = vld [vmem:[%s2 + $0xa4] sm:$0xf]
    %v89 = vld [vmem:[%s2 + $0xa8] sm:$0xff]
    %v90 = vld [vmem:[%s2 + $0xb0] sm:$0xf]
    %v91 = vld [vmem:[%s2 + $0xb4] sm:$0xff]
    %v92 = vld [vmem:[%s2 + $0xbc] sm:$0xf]
    %v93 = vld [vmem:[%s3] sm:$0xff]
    %v94 = vld [vmem:[%s3 + $0x8] sm:$0xf]
    %v95 = vld [vmem:[%s3 + $0xc] sm:$0xff]
    %v96 = vld [vmem:[%s3 + $0x14] sm:$0xf]
    %v97 = vld [vmem:[%s3 + $0x18] sm:$0xff]
    %v98 = vld [vmem:[%s3 + $0x20] sm:$0xf]
    %v99 = vld [vmem:[%s3 + $0x24] sm:$0xff]
    %v100 = vld [vmem:[%s3 + $0x2c] sm:$0xf]
    %v101 = vld [vmem:[%s3 + $0x30] sm:$0xff]
    %v102 = vld [vmem:[%s3 + $0x38] sm:$0xf]
    %v103 = vld [vmem:[%s3 + $0x3c] sm:$0xff]
    %v104 = vld [vmem:[%s3 + $0x44] sm:$0xf]
    %v105 = vld [vmem:[%s3 + $0x48] sm:$0xff]
    %v106 = vld [vmem:[%s3 + $0x50] sm:$0xf]
    %v107 = vld [vmem:[%s3 + $0x54] sm:$0xff]
    %v108 = vld [vmem:[%s3 + $0x5c] sm:$0xf]
    %v109 = vld [vmem:[%s3 + $0x60] sm:$0xff]
    %v110 = vld [vmem:[%s3 + $0x68] sm:$0xf]
    %v111 = vld [vmem:[%s3 + $0x6c] sm:$0xff]
    %v112 = vld [vmem:[%s3 + $0x74] sm:$0xf]
    %v113 = vld [vmem:[%s3 + $0x78] sm:$0xff]
    %v114 = vld [vmem:[%s3 + $0x80] sm:$0xf]
    %v115 = vld [vmem:[%s3 + $0x84] sm:$0xff]
    %v116 = vld [vmem:[%s3 + $0x8c] sm:$0xf]
    %v117 = vld [vmem:[%s3 + $0x90] sm:$0xff]
    %v118 = vld [vmem:[%s3 + $0x98] sm:$0xf]
    %v119 = vld [vmem:[%s3 + $0x9c] sm:$0xff]
    %v120 = vld [vmem:[%s3 + $0xa4] sm:$0xf]
    %v121 = vld [vmem:[%s3 + $0xa8] sm:$0xff]
    %v122 = vld [vmem:[%s3 + $0xb0] sm:$0xf]
    %v123 = vld [vmem:[%s3 + $0xb4] sm:$0xff]
    %v124 = vld [vmem:[%s3 + $0xbc] sm:$0xf]
    %v125 = vld [vmem:[%s4] sm:$0x7]
    %v126 = vld [vmem:[%s5] sm:$0xff]
    %v127 = vld [vmem:[%s5 + $0x8] sm:$0xff]
    %v128 = vld [vmem:[%s5 + $0x10] sm:$0xff]
    %v129 = vld [vmem:[%s5 + $0x18] sm:$0xff]
    %v130 = vld [vmem:[%s5 + $0x20] sm:$0xff]
    %v131 = vld [vmem:[%s5 + $0x28] sm:$0xff]
    %v132 = vld [vmem:[%s5 + $0x30] sm:$0xff]
    %v133 = vld [vmem:[%s5 + $0x38] sm:$0xff]
    %v134 = vld [vmem:[%s5 + $0x40] sm:$0xff]
    %v135 = vld [vmem:[%s5 + $0x48] sm:$0xff]
    %v136 = vld [vmem:[%s5 + $0x50] sm:$0xff]
    %v137 = vld [vmem:[%s5 + $0x58] sm:$0xff]
    %v138 = vld [vmem:[%s5 + $0x60] sm:$0xff]
    %v139 = vld [vmem:[%s5 + $0x68] sm:$0xff]
    %v140 = vld [vmem:[%s5 + $0x70] sm:$0xff]
    %v141 = vld [vmem:[%s5 + $0x78] sm:$0xff]
    %v142 = vld [vmem:[%s5 + $0x80] sm:$0xff]
    %v143 = vld [vmem:[%s5 + $0x88] sm:$0xff]
    %v144 = vld [vmem:[%s5 + $0x90] sm:$0xff]
    %v145 = vld [vmem:[%s5 + $0x98] sm:$0xff]
    %v146 = vld [vmem:[%s5 + $0xa0] sm:$0xff]
    %v147 = vld [vmem:[%s5 + $0xa8] sm:$0xff]
    %v148 = vld [vmem:[%s5 + $0xb0] sm:$0xff]
    %v149 = vld [vmem:[%s5 + $0xb8] sm:$0xff]
    %v150 = vld [vmem:[%s5 + $0xc0] sm:$0xff]
    %v151 = vld [vmem:[%s5 + $0xc8] sm:$0xff]
    %v152 = vld [vmem:[%s5 + $0xd0] sm:$0xff]
    %v153 = vld [vmem:[%s5 + $0xd8] sm:$0xff]
    %v154 = vld [vmem:[%s5 + $0xe0] sm:$0xff]
    %v155 = vld [vmem:[%s5 + $0xe8] sm:$0xff]
    %v156 = vld [vmem:[%s5 + $0xf0] sm:$0xff]
    %v157 = vld [vmem:[%s5 + $0xf8] sm:$0xff]
    %v158 = vld [vmem:[%s5 + $0x100] sm:$0xff]
    %v159 = vld [vmem:[%s5 + $0x108] sm:$0xff]
    %v160 = vld [vmem:[%s5 + $0x110] sm:$0xff]
    %v161 = vld [vmem:[%s5 + $0x118] sm:$0xff]
    %v162 = vld [vmem:[%s5 + $0x120] sm:$0xff]
    %v163 = vld [vmem:[%s5 + $0x128] sm:$0xff]
    %v164 = vld [vmem:[%s5 + $0x130] sm:$0xff]
    %v165 = vld [vmem:[%s5 + $0x138] sm:$0xff]
    %v166 = vld [vmem:[%s5 + $0x140] sm:$0xff]
    %v167 = vld [vmem:[%s5 + $0x148] sm:$0xff]
    %v168 = vld [vmem:[%s5 + $0x150] sm:$0xff]
    %v169 = vld [vmem:[%s5 + $0x158] sm:$0xff]
    %v170 = vld [vmem:[%s5 + $0x160] sm:$0xff]
    %v171 = vld [vmem:[%s5 + $0x168] sm:$0xff]
    %v172 = vld [vmem:[%s5 + $0x170] sm:$0xff]
    %v173 = vld [vmem:[%s5 + $0x178] sm:$0xff]
    %v174 = vld [vmem:[%s6] sm:$0x1]
    %v175 = vld [vmem:[%s7] sm:$0xff]
    %v176 = vld [vmem:[%s7 + $0x8] sm:$0xff]
    %v177 = vld [vmem:[%s7 + $0x10] sm:$0xff]
    %v178 = vld [vmem:[%s7 + $0x18] sm:$0xff]
    %v179 = vld [vmem:[%s7 + $0x20] sm:$0xff]
    %v180 = vld [vmem:[%s7 + $0x28] sm:$0xff]
    %v181 = vld [vmem:[%s7 + $0x30] sm:$0xff]
    %v182 = vld [vmem:[%s7 + $0x38] sm:$0xff]
    %v183 = vld [vmem:[%s7 + $0x40] sm:$0xff]
    %v184 = vld [vmem:[%s7 + $0x48] sm:$0xff]
    %v185 = vld [vmem:[%s7 + $0x50] sm:$0xff]
    %v186 = vld [vmem:[%s7 + $0x58] sm:$0xff]
    %v187 = vld [vmem:[%s7 + $0x60] sm:$0xff]
    %v188 = vld [vmem:[%s7 + $0x68] sm:$0xff]
    %v189 = vld [vmem:[%s7 + $0x70] sm:$0xff]
    %v190 = vld [vmem:[%s7 + $0x78] sm:$0xff]
    %v191 = vld [vmem:[%s8] sm:$0x1]
    %v192 = vld [vmem:[%s9] sm:$0xff]
    %v193 = vld [vmem:[%s9 + $0x8] sm:$0xff]
    %v194 = vld [vmem:[%s9 + $0x10] sm:$0xff]
    %v195 = vld [vmem:[%s9 + $0x18] sm:$0xff]
    %v196 = vld [vmem:[%s9 + $0x20] sm:$0xff]
    %v197 = vld [vmem:[%s9 + $0x28] sm:$0xff]
    %v198 = vld [vmem:[%s9 + $0x30] sm:$0xff]
    %v199 = vld [vmem:[%s9 + $0x38] sm:$0xff]
    %v200 = vld [vmem:[%s9 + $0x40] sm:$0xff]
    %v201 = vld [vmem:[%s9 + $0x48] sm:$0xff]
    %v202 = vld [vmem:[%s9 + $0x50] sm:$0xff]
    %v203 = vld [vmem:[%s9 + $0x58] sm:$0xff]
    %v204 = vld [vmem:[%s9 + $0x60] sm:$0xff]
    %v205 = vld [vmem:[%s9 + $0x68] sm:$0xff]
    %v206 = vld [vmem:[%s9 + $0x70] sm:$0xff]
    %v207 = vld [vmem:[%s9 + $0x78] sm:$0xff]
    %v208 = vld [vmem:[%s10] sm:$0x3]
    %v209 = vld [vmem:[%s11] sm:$0xf]
    %v210 = vld [vmem:[%s11 + $0x4] sm:$0xf]
    %v211 = vld [vmem:[%s11 + $0x8] sm:$0xf]
    %v212 = vld [vmem:[%s11 + $0xc] sm:$0xf]
    %v213 = vld [vmem:[%s11 + $0x10] sm:$0xf]
    %v214 = vld [vmem:[%s11 + $0x14] sm:$0xf]
    %v215 = vld [vmem:[%s11 + $0x18] sm:$0xf]
    %v216 = vld [vmem:[%s11 + $0x1c] sm:$0xf]
    %v217 = vld [vmem:[%s11 + $0x20] sm:$0xf]
    %v218 = vld [vmem:[%s11 + $0x24] sm:$0xf]
    %v219 = vld [vmem:[%s11 + $0x28] sm:$0xf]
    %v220 = vld [vmem:[%s11 + $0x2c] sm:$0xf]
    %v221 = vld [vmem:[%s11 + $0x30] sm:$0xf]
    %v222 = vld [vmem:[%s11 + $0x34] sm:$0xf]
    %v223 = vld [vmem:[%s11 + $0x38] sm:$0xf]
    %v224 = vld [vmem:[%s11 + $0x3c] sm:$0xf]
    %v225 = vld [vmem:[%s11 + $0x40] sm:$0xf]
    %v226 = vld [vmem:[%s11 + $0x44] sm:$0xf]
    %v227 = vld [vmem:[%s11 + $0x48] sm:$0xf]
    %v228 = vld [vmem:[%s11 + $0x4c] sm:$0xf]
    %v229 = vld [vmem:[%s11 + $0x50] sm:$0xf]
    %v230 = vld [vmem:[%s11 + $0x54] sm:$0xf]
    %v231 = vld [vmem:[%s11 + $0x58] sm:$0xf]
    %v232 = vld [vmem:[%s11 + $0x5c] sm:$0xf]
    %v233 = vld [vmem:[%s11 + $0x60] sm:$0xf]
    %v234 = vld [vmem:[%s11 + $0x64] sm:$0xf]
    %v235 = vld [vmem:[%s11 + $0x68] sm:$0xf]
    %v236 = vld [vmem:[%s11 + $0x6c] sm:$0xf]
    %v237 = vld [vmem:[%s11 + $0x70] sm:$0xf]
    %v238 = vld [vmem:[%s11 + $0x74] sm:$0xf]
    %v239 = vld [vmem:[%s11 + $0x78] sm:$0xf]
    %v240 = vld [vmem:[%s11 + $0x7c] sm:$0xf]
    %v241 = vld [vmem:[%s11 + $0x80] sm:$0xf]
    %v242 = vld [vmem:[%s11 + $0x84] sm:$0xf]
    %v243 = vld [vmem:[%s11 + $0x88] sm:$0xf]
    %v244 = vld [vmem:[%s11 + $0x8c] sm:$0xf]
    %v245 = vld [vmem:[%s11 + $0x90] sm:$0xf]
    %v246 = vld [vmem:[%s11 + $0x94] sm:$0xf]
    %v247 = vld [vmem:[%s11 + $0x98] sm:$0xf]
    %v248 = vld [vmem:[%s11 + $0x9c] sm:$0xf]
    %v249 = vld [vmem:[%s11 + $0xa0] sm:$0xf]
    %v250 = vld [vmem:[%s11 + $0xa4] sm:$0xf]
    %v251 = vld [vmem:[%s11 + $0xa8] sm:$0xf]
    %v252 = vld [vmem:[%s11 + $0xac] sm:$0xf]
    %v253 = vld [vmem:[%s11 + $0xb0] sm:$0xf]
    %v254 = vld [vmem:[%s11 + $0xb4] sm:$0xf]
    %v255 = vld [vmem:[%s11 + $0xb8] sm:$0xf]
    %v256 = vld [vmem:[%s11 + $0xbc] sm:$0xf]
    %v257 = vld [vmem:[%s11 + $0xc0] sm:$0xf]
    %v258 = vld [vmem:[%s11 + $0xc4] sm:$0xf]
    %v259 = vld [vmem:[%s11 + $0xc8] sm:$0xf]
    %v260 = vld [vmem:[%s11 + $0xcc] sm:$0xf]
    %v261 = vld [vmem:[%s11 + $0xd0] sm:$0xf]
    %v262 = vld [vmem:[%s11 + $0xd4] sm:$0xf]
    %v263 = vld [vmem:[%s11 + $0xd8] sm:$0xf]
    %v264 = vld [vmem:[%s11 + $0xdc] sm:$0xf]
    %v265 = vld [vmem:[%s11 + $0xe0] sm:$0xf]
    %v266 = vld [vmem:[%s11 + $0xe4] sm:$0xf]
    %v267 = vld [vmem:[%s11 + $0xe8] sm:$0xf]
    %v268 = vld [vmem:[%s11 + $0xec] sm:$0xf]
    %v269 = vld [vmem:[%s11 + $0xf0] sm:$0xf]
    %v270 = vld [vmem:[%s11 + $0xf4] sm:$0xf]
    %v271 = vld [vmem:[%s11 + $0xf8] sm:$0xf]
    %v272 = vld [vmem:[%s11 + $0xfc] sm:$0xf]
    %v281 = vunpack.c.l.b16 %v53
    %v282 = vunpack.c.l.b16 %v54
    %v283 = vunpack.c.l.b16 %v55
    %v284 = vunpack.c.l.b16 %v56
    %v285 = vunpack.c.l.b16 %v57
    %v286 = vunpack.c.l.b16 %v58
    %v287 = vunpack.c.l.b16 %v59
    %v288 = vunpack.c.l.b16 %v60
    %v289 = vpack.c.b16 %v282, %v281
    %v290 = vpack.c.b16 %v284, %v283
    %v291 = vpack.c.b16 %v286, %v285
    %v292 = vpack.c.b16 %v288, %v287
    %v301 = vunpack.c.l.b16 %v45
    %v302 = vunpack.c.l.b16 %v46
    %v303 = vunpack.c.l.b16 %v47
    %v304 = vunpack.c.l.b16 %v48
    %v305 = vunpack.c.l.b16 %v49
    %v306 = vunpack.c.l.b16 %v50
    %v307 = vunpack.c.l.b16 %v51
    %v308 = vunpack.c.l.b16 %v52
    %v309 = vpack.c.b16 %v302, %v301
    %v310 = vpack.c.b16 %v304, %v303
    %v311 = vpack.c.b16 %v306, %v305
    %v312 = vpack.c.b16 %v308, %v307
    %vm317 = vcmask 523264
    %v319 = vsel %vm317, %v289, 0
    %v322 = vsel %vm317, %v290, 0
    %v325 = vsel %vm317, %v291, 0
    %v328 = vsel %vm317, %v292, 0
    %330 = vmatprep.subr.bf16.mxu0 0
    %331 = vmatpush1.bf16.msra.mxu0 %v309
    %332 = vmatprep.subr.bf16.mxu0 0
    %333 = vmatpush1.bf16.msra.mxu0 %v310
    %334 = vmatprep.subr.bf16.mxu0 0
    %335 = vmatpush1.bf16.msra.mxu0 %v311
    %336 = vmatprep.subr.bf16.mxu0 0
    %337 = vmatpush1.bf16.msra.mxu0 %v312
    %338 = vmatprep.subr.bf16.mxu0 0
    %339 = vmatpush1.bf16.msra.mxu0 0
    %340 = vmatprep.subr.bf16.mxu0 0
    %341 = vmatpush1.bf16.msra.mxu0 0
    %342 = vmatprep.subr.bf16.mxu0 0
    %343 = vmatpush1.bf16.msra.mxu0 0
    %344 = vmatprep.subr.bf16.mxu0 0
    %345 = vmatpush1.bf16.msra.mxu0 0
    %346 = vmatprep.subr.bf16.mxu0 0
    %347 = vmatpush1.bf16.msra.mxu0 0
    %348 = vmatprep.subr.bf16.mxu0 0
    %349 = vmatpush1.bf16.msra.mxu0 0
    %350 = vmatprep.subr.bf16.mxu0 0
    %351 = vmatpush1.bf16.msra.mxu0 0
    %352 = vmatprep.subr.bf16.mxu0 0
    %353 = vmatpush1.bf16.msra.mxu0 0
    %354 = vmatprep.subr.bf16.mxu0 0
    %355 = vmatpush1.bf16.msra.mxu0 0
    %356 = vmatprep.subr.bf16.mxu0 0
    %357 = vmatpush1.bf16.msra.mxu0 0
    %358 = vmatprep.subr.bf16.mxu0 0
    %359 = vmatpush1.bf16.msra.mxu0 0
    %360 = vmatprep.subr.bf16.mxu0 0
    %361 = vmatpush1.bf16.msra.mxu0 0
    %362 = vmatprep.mubr.bf16.mxu0 0
    %363 = vmatmul.mubr.bf16.gmra.mrb[0].mxu0 %v319
    %v364 = vpop.f32.mrb[0].mxu0
    %v365 = vadd.f32 0.0, %v364
    %v366 = vpop.f32.mrb[0].mxu0
    %v367 = vpop.f32.mrb[0].mxu0
    %v368 = vadd.f32 0.0, %v367
    %v369 = vpop.f32.mrb[0].mxu0
    %370 = vmatprep.mubr.bf16.mxu0 0
    %371 = vmatmul.mubr.bf16.gmra.mrb[0].mxu0 %v322
    %v372 = vpop.f32.mrb[0].mxu0
    %v373 = vadd.f32 0.0, %v372
    %v374 = vpop.f32.mrb[0].mxu0
    %v375 = vpop.f32.mrb[0].mxu0
    %v376 = vadd.f32 0.0, %v375
    %v377 = vpop.f32.mrb[0].mxu0
    %378 = vmatprep.mubr.bf16.mxu0 0
    %379 = vmatmul.mubr.bf16.gmra.mrb[0].mxu0 %v325
    %v380 = vpop.f32.mrb[0].mxu0
    %v381 = vadd.f32 0.0, %v380
    %v382 = vpop.f32.mrb[0].mxu0
    %v383 = vpop.f32.mrb[0].mxu0
    %v384 = vadd.f32 0.0, %v383
    %v385 = vpop.f32.mrb[0].mxu0
    %386 = vmatprep.mubr.bf16.mxu0 0
    %387 = vmatmul.mubr.bf16.gmra.mrb[0].mxu0 %v328
    %v388 = vpop.f32.mrb[0].mxu0
    %v389 = vadd.f32 0.0, %v388
    %v390 = vpop.f32.mrb[0].mxu0
    %v391 = vpop.f32.mrb[0].mxu0
    %v392 = vadd.f32 0.0, %v391
    %v393 = vpop.f32.mrb[0].mxu0
    %394 = vdwg.mxu0
    %v395 = vpack.c.bf16 %v368, %v365
    %v396 = vpack.c.bf16 %v376, %v373
    %v397 = vpack.c.bf16 %v384, %v381
    %v398 = vpack.c.bf16 %v392, %v389
    %v431 = vunpack.c.l.b16 %v93
    %v432 = vunpack.c.h.b16 %v93
    %v433 = vunpack.c.l.b16 %v94
    %v434 = vunpack.c.l.b16 %v95
    %v435 = vunpack.c.h.b16 %v95
    %v436 = vunpack.c.l.b16 %v96
    %v437 = vunpack.c.l.b16 %v97
    %v438 = vunpack.c.h.b16 %v97
    %v439 = vunpack.c.l.b16 %v98
    %v440 = vunpack.c.l.b16 %v99
    %v441 = vunpack.c.h.b16 %v99
    %v442 = vunpack.c.l.b16 %v100
    %v443 = vunpack.c.l.b16 %v101
    %v444 = vunpack.c.h.b16 %v101
    %v445 = vunpack.c.l.b16 %v102
    %v446 = vunpack.c.l.b16 %v103
    %v447 = vunpack.c.h.b16 %v103
    %v448 = vunpack.c.l.b16 %v104
    %v449 = vunpack.c.l.b16 %v105
    %v450 = vunpack.c.h.b16 %v105
    %v451 = vunpack.c.l.b16 %v106
    %v452 = vunpack.c.l.b16 %v107
    %v453 = vunpack.c.h.b16 %v107
    %v454 = vunpack.c.l.b16 %v108
    %v455 = vunpack.c.l.b16 %v109
    %v456 = vunpack.c.h.b16 %v109
    %v457 = vunpack.c.l.b16 %v110
    %v458 = vunpack.c.l.b16 %v111
    %v459 = vunpack.c.h.b16 %v111
    %v460 = vunpack.c.l.b16 %v112
    %v461 = vunpack.c.l.b16 %v113
    %v462 = vunpack.c.h.b16 %v113
    %v463 = vunpack.c.l.b16 %v114
    %v464 = vunpack.c.l.b16 %v115
    %v465 = vunpack.c.h.b16 %v115
    %v466 = vunpack.c.l.b16 %v116
    %v467 = vunpack.c.l.b16 %v117
    %v468 = vunpack.c.h.b16 %v117
    %v469 = vunpack.c.l.b16 %v118
    %v470 = vunpack.c.l.b16 %v119
    %v471 = vunpack.c.h.b16 %v119
    %v472 = vunpack.c.l.b16 %v120
    %v473 = vunpack.c.l.b16 %v121
    %v474 = vunpack.c.h.b16 %v121
    %v475 = vunpack.c.l.b16 %v122
    %v476 = vunpack.c.l.b16 %v123
    %v477 = vunpack.c.h.b16 %v123
    %v478 = vunpack.c.l.b16 %v124
    %v479 = vpack.c.b16 %v434, %v431
    %v480 = vpack.c.b16 %v435, %v432
    %v481 = vpack.c.b16 %v436, %v433
    %v482 = vpack.c.b16 %v440, %v437
    %v483 = vpack.c.b16 %v441, %v438
    %v484 = vpack.c.b16 %v442, %v439
    %v485 = vpack.c.b16 %v446, %v443
    %v486 = vpack.c.b16 %v447, %v444
    %v487 = vpack.c.b16 %v448, %v445
    %v488 = vpack.c.b16 %v452, %v449
    %v489 = vpack.c.b16 %v453, %v450
    %v490 = vpack.c.b16 %v454, %v451
    %v491 = vpack.c.b16 %v458, %v455
    %v492 = vpack.c.b16 %v459, %v456
    %v493 = vpack.c.b16 %v460, %v457
    %v494 = vpack.c.b16 %v464, %v461
    %v495 = vpack.c.b16 %v465, %v462
    %v496 = vpack.c.b16 %v466, %v463
    %v497 = vpack.c.b16 %v470, %v467
    %v498 = vpack.c.b16 %v471, %v468
    %v499 = vpack.c.b16 %v472, %v469
    %v500 = vpack.c.b16 %v476, %v473
    %v501 = vpack.c.b16 %v477, %v474
    %v502 = vpack.c.b16 %v478, %v475
    %527 = vmatprep.subr.bf16.mxu0 %v480
    %528 = vmatpush1.bf16.msra.mxu0 %v479
    %529 = vmatprep.subr.bf16.mxu0 %v483
    %530 = vmatpush1.bf16.msra.mxu0 %v482
    %531 = vmatprep.subr.bf16.mxu0 %v486
    %532 = vmatpush1.bf16.msra.mxu0 %v485
    %533 = vmatprep.subr.bf16.mxu0 %v489
    %534 = vmatpush1.bf16.msra.mxu0 %v488
    %535 = vmatprep.subr.bf16.mxu0 %v492
    %536 = vmatpush1.bf16.msra.mxu0 %v491
    %537 = vmatprep.subr.bf16.mxu0 %v495
    %538 = vmatpush1.bf16.msra.mxu0 %v494
    %539 = vmatprep.subr.bf16.mxu0 %v498
    %540 = vmatpush1.bf16.msra.mxu0 %v497
    %541 = vmatprep.subr.bf16.mxu0 %v501
    %542 = vmatpush1.bf16.msra.mxu0 %v500
    %543 = vmatprep.subr.bf16.mxu0 0
    %544 = vmatpush1.bf16.msra.mxu0 0
    %545 = vmatprep.subr.bf16.mxu0 0
    %546 = vmatpush1.bf16.msra.mxu0 0
    %547 = vmatprep.subr.bf16.mxu0 0
    %548 = vmatpush1.bf16.msra.mxu0 0
    %549 = vmatprep.subr.bf16.mxu0 0
    %550 = vmatpush1.bf16.msra.mxu0 0
    %551 = vmatprep.subr.bf16.mxu0 0
    %552 = vmatpush1.bf16.msra.mxu0 0
    %553 = vmatprep.subr.bf16.mxu0 0
    %554 = vmatpush1.bf16.msra.mxu0 0
    %555 = vmatprep.subr.bf16.mxu0 0
    %556 = vmatpush1.bf16.msra.mxu0 0
    %557 = vmatprep.subr.bf16.mxu0 0
    %558 = vmatpush1.bf16.msra.mxu0 0
    %559 = vmatprep.mubr.bf16.mxu0 0
    %560 = vmatmul.mubr.bf16.gmra.mrb[0].mxu0 %v395
    %v561 = vpop.f32.mrb[0].mxu0
    %v562 = vadd.f32 0.0, %v561
    %v563 = vpop.f32.mrb[0].mxu0
    %v564 = vadd.f32 0.0, %v563
    %v565 = vpop.f32.mrb[0].mxu0
    %v566 = vadd.f32 0.0, %v565
    %v567 = vpop.f32.mrb[0].mxu0
    %v568 = vadd.f32 0.0, %v567
    %569 = vmatprep.mubr.bf16.mxu0 0
    %570 = vmatmul.mubr.bf16.gmra.mrb[0].mxu0 %v396
    %v571 = vpop.f32.mrb[0].mxu0
    %v572 = vadd.f32 0.0, %v571
    %v573 = vpop.f32.mrb[0].mxu0
    %v574 = vadd.f32 0.0, %v573
    %v575 = vpop.f32.mrb[0].mxu0
    %v576 = vadd.f32 0.0, %v575
    %v577 = vpop.f32.mrb[0].mxu0
    %v578 = vadd.f32 0.0, %v577
    %579 = vmatprep.mubr.bf16.mxu0 0
    %580 = vmatmul.mubr.bf16.gmra.mrb[0].mxu0 %v397
    %v581 = vpop.f32.mrb[0].mxu0
    %v582 = vadd.f32 0.0, %v581
    %v583 = vpop.f32.mrb[0].mxu0
    %v584 = vadd.f32 0.0, %v583
    %v585 = vpop.f32.mrb[0].mxu0
    %v586 = vadd.f32 0.0, %v585
    %v587 = vpop.f32.mrb[0].mxu0
    %v588 = vadd.f32 0.0, %v587
    %589 = vmatprep.mubr.bf16.mxu0 0
    %590 = vmatmul.mubr.bf16.gmra.mrb[0].mxu0 %v398
    %v591 = vpop.f32.mrb[0].mxu0
    %v592 = vadd.f32 0.0, %v591
    %v593 = vpop.f32.mrb[0].mxu0
    %v594 = vadd.f32 0.0, %v593
    %v595 = vpop.f32.mrb[0].mxu0
    %v596 = vadd.f32 0.0, %v595
    %v597 = vpop.f32.mrb[0].mxu0
    %v598 = vadd.f32 0.0, %v597
    %599 = vdwg.mxu0
    %600 = vmatprep.subr.bf16.mxu0 0
    %601 = vmatpush1.bf16.msra.mxu0 %v481
    %602 = vmatprep.subr.bf16.mxu0 0
    %603 = vmatpush1.bf16.msra.mxu0 %v484
    %604 = vmatprep.subr.bf16.mxu0 0
    %605 = vmatpush1.bf16.msra.mxu0 %v487
    %606 = vmatprep.subr.bf16.mxu0 0
    %607 = vmatpush1.bf16.msra.mxu0 %v490
    %608 = vmatprep.subr.bf16.mxu0 0
    %609 = vmatpush1.bf16.msra.mxu0 %v493
    %610 = vmatprep.subr.bf16.mxu0 0
    %611 = vmatpush1.bf16.msra.mxu0 %v496
    %612 = vmatprep.subr.bf16.mxu0 0
    %613 = vmatpush1.bf16.msra.mxu0 %v499
    %614 = vmatprep.subr.bf16.mxu0 0
    %615 = vmatpush1.bf16.msra.mxu0 %v502
    %616 = vmatprep.subr.bf16.mxu0 0
    %617 = vmatpush1.bf16.msra.mxu0 0
    %618 = vmatprep.subr.bf16.mxu0 0
    %619 = vmatpush1.bf16.msra.mxu0 0
    %620 = vmatprep.subr.bf16.mxu0 0
    %621 = vmatpush1.bf16.msra.mxu0 0
    %622 = vmatprep.subr.bf16.mxu0 0
    %623 = vmatpush1.bf16.msra.mxu0 0
    %624 = vmatprep.subr.bf16.mxu0 0
    %625 = vmatpush1.bf16.msra.mxu0 0
    %626 = vmatprep.subr.bf16.mxu0 0
    %627 = vmatpush1.bf16.msra.mxu0 0
    %628 = vmatprep.subr.bf16.mxu0 0
    %629 = vmatpush1.bf16.msra.mxu0 0
    %630 = vmatprep.subr.bf16.mxu0 0
    %631 = vmatpush1.bf16.msra.mxu0 0
    %632 = vmatprep.mubr.bf16.mxu0 0
    %633 = vmatmul.mubr.bf16.gmra.mrb[0].mxu0 %v395
    %v634 = vpop.f32.mrb[0].mxu0
    %v635 = vadd.f32 0.0, %v634
    %v636 = vpop.f32.mrb[0].mxu0
    %v637 = vpop.f32.mrb[0].mxu0
    %v638 = vadd.f32 0.0, %v637
    %v639 = vpop.f32.mrb[0].mxu0
    %640 = vmatprep.mubr.bf16.mxu0 0
    %641 = vmatmul.mubr.bf16.gmra.mrb[0].mxu0 %v396
    %v642 = vpop.f32.mrb[0].mxu0
    %v643 = vadd.f32 0.0, %v642
    %v644 = vpop.f32.mrb[0].mxu0
    %v645 = vpop.f32.mrb[0].mxu0
    %v646 = vadd.f32 0.0, %v645
    %v647 = vpop.f32.mrb[0].mxu0
    %648 = vmatprep.mubr.bf16.mxu0 0
    %649 = vmatmul.mubr.bf16.gmra.mrb[0].mxu0 %v397
    %v650 = vpop.f32.mrb[0].mxu0
    %v651 = vadd.f32 0.0, %v650
    %v652 = vpop.f32.mrb[0].mxu0
    %v653 = vpop.f32.mrb[0].mxu0
    %v654 = vadd.f32 0.0, %v653
    %v655 = vpop.f32.mrb[0].mxu0
    %656 = vmatprep.mubr.bf16.mxu0 0
    %657 = vmatmul.mubr.bf16.gmra.mrb[0].mxu0 %v398
    %v658 = vpop.f32.mrb[0].mxu0
    %v659 = vadd.f32 0.0, %v658
    %v660 = vpop.f32.mrb[0].mxu0
    %v661 = vpop.f32.mrb[0].mxu0
    %v662 = vadd.f32 0.0, %v661
    %v663 = vpop.f32.mrb[0].mxu0
    %664 = vdwg.mxu0
    %v697 = vunpack.c.l.b16 %v61
    %v698 = vunpack.c.h.b16 %v61
    %v699 = vunpack.c.l.b16 %v62
    %v700 = vunpack.c.l.b16 %v63
    %v701 = vunpack.c.h.b16 %v63
    %v702 = vunpack.c.l.b16 %v64
    %v703 = vunpack.c.l.b16 %v65
    %v704 = vunpack.c.h.b16 %v65
    %v705 = vunpack.c.l.b16 %v66
    %v706 = vunpack.c.l.b16 %v67
    %v707 = vunpack.c.h.b16 %v67
    %v708 = vunpack.c.l.b16 %v68
    %v709 = vunpack.c.l.b16 %v69
    %v710 = vunpack.c.h.b16 %v69
    %v711 = vunpack.c.l.b16 %v70
    %v712 = vunpack.c.l.b16 %v71
    %v713 = vunpack.c.h.b16 %v71
    %v714 = vunpack.c.l.b16 %v72
    %v715 = vunpack.c.l.b16 %v73
    %v716 = vunpack.c.h.b16 %v73
    %v717 = vunpack.c.l.b16 %v74
    %v718 = vunpack.c.l.b16 %v75
    %v719 = vunpack.c.h.b16 %v75
    %v720 = vunpack.c.l.b16 %v76
    %v721 = vunpack.c.l.b16 %v77
    %v722 = vunpack.c.h.b16 %v77
    %v723 = vunpack.c.l.b16 %v78
    %v724 = vunpack.c.l.b16 %v79
    %v725 = vunpack.c.h.b16 %v79
    %v726 = vunpack.c.l.b16 %v80
    %v727 = vunpack.c.l.b16 %v81
    %v728 = vunpack.c.h.b16 %v81
    %v729 = vunpack.c.l.b16 %v82
    %v730 = vunpack.c.l.b16 %v83
    %v731 = vunpack.c.h.b16 %v83
    %v732 = vunpack.c.l.b16 %v84
    %v733 = vunpack.c.l.b16 %v85
    %v734 = vunpack.c.h.b16 %v85
    %v735 = vunpack.c.l.b16 %v86
    %v736 = vunpack.c.l.b16 %v87
    %v737 = vunpack.c.h.b16 %v87
    %v738 = vunpack.c.l.b16 %v88
    %v739 = vunpack.c.l.b16 %v89
    %v740 = vunpack.c.h.b16 %v89
    %v741 = vunpack.c.l.b16 %v90
    %v742 = vunpack.c.l.b16 %v91
    %v743 = vunpack.c.h.b16 %v91
    %v744 = vunpack.c.l.b16 %v92
    %v745 = vpack.c.b16 %v700, %v697
    %v746 = vpack.c.b16 %v701, %v698
    %v747 = vpack.c.b16 %v702, %v699
    %v748 = vpack.c.b16 %v706, %v703
    %v749 = vpack.c.b16 %v707, %v704
    %v750 = vpack.c.b16 %v708, %v705
    %v751 = vpack.c.b16 %v712, %v709
    %v752 = vpack.c.b16 %v713, %v710
    %v753 = vpack.c.b16 %v714, %v711
    %v754 = vpack.c.b16 %v718, %v715
    %v755 = vpack.c.b16 %v719, %v716
    %v756 = vpack.c.b16 %v720, %v717
    %v757 = vpack.c.b16 %v724, %v721
    %v758 = vpack.c.b16 %v725, %v722
    %v759 = vpack.c.b16 %v726, %v723
    %v760 = vpack.c.b16 %v730, %v727
    %v761 = vpack.c.b16 %v731, %v728
    %v762 = vpack.c.b16 %v732, %v729
    %v763 = vpack.c.b16 %v736, %v733
    %v764 = vpack.c.b16 %v737, %v734
    %v765 = vpack.c.b16 %v738, %v735
    %v766 = vpack.c.b16 %v742, %v739
    %v767 = vpack.c.b16 %v743, %v740
    %v768 = vpack.c.b16 %v744, %v741
    %793 = vmatprep.subr.bf16.mxu0 %v746
    %794 = vmatpush1.bf16.msra.mxu0 %v745
    %795 = vmatprep.subr.bf16.mxu0 %v749
    %796 = vmatpush1.bf16.msra.mxu0 %v748
    %797 = vmatprep.subr.bf16.mxu0 %v752
    %798 = vmatpush1.bf16.msra.mxu0 %v751
    %799 = vmatprep.subr.bf16.mxu0 %v755
    %800 = vmatpush1.bf16.msra.mxu0 %v754
    %801 = vmatprep.subr.bf16.mxu0 %v758
    %802 = vmatpush1.bf16.msra.mxu0 %v757
    %803 = vmatprep.subr.bf16.mxu0 %v761
    %804 = vmatpush1.bf16.msra.mxu0 %v760
    %805 = vmatprep.subr.bf16.mxu0 %v764
    %806 = vmatpush1.bf16.msra.mxu0 %v763
    %807 = vmatprep.subr.bf16.mxu0 %v767
    %808 = vmatpush1.bf16.msra.mxu0 %v766
    %809 = vmatprep.subr.bf16.mxu0 0
    %810 = vmatpush1.bf16.msra.mxu0 0
    %811 = vmatprep.subr.bf16.mxu0 0
    %812 = vmatpush1.bf16.msra.mxu0 0
    %813 = vmatprep.subr.bf16.mxu0 0
    %814 = vmatpush1.bf16.msra.mxu0 0
    %815 = vmatprep.subr.bf16.mxu0 0
    %816 = vmatpush1.bf16.msra.mxu0 0
    %817 = vmatprep.subr.bf16.mxu0 0
    %818 = vmatpush1.bf16.msra.mxu0 0
    %819 = vmatprep.subr.bf16.mxu0 0
    %820 = vmatpush1.bf16.msra.mxu0 0
    %821 = vmatprep.subr.bf16.mxu0 0
    %822 = vmatpush1.bf16.msra.mxu0 0
    %823 = vmatprep.subr.bf16.mxu0 0
    %824 = vmatpush1.bf16.msra.mxu0 0
    %825 = vmatprep.mubr.bf16.mxu0 0
    %826 = vmatmul.mubr.bf16.gmra.mrb[0].mxu0 %v309
    %v827 = vpop.f32.mrb[0].mxu0
    %v828 = vadd.f32 %v562, %v827
    %v829 = vpop.f32.mrb[0].mxu0
    %v830 = vadd.f32 %v564, %v829
    %v831 = vpop.f32.mrb[0].mxu0
    %v832 = vadd.f32 %v566, %v831
    %v833 = vpop.f32.mrb[0].mxu0
    %v834 = vadd.f32 %v568, %v833
    %835 = vmatprep.mubr.bf16.mxu0 0
    %836 = vmatmul.mubr.bf16.gmra.mrb[0].mxu0 %v310
    %v837 = vpop.f32.mrb[0].mxu0
    %v838 = vadd.f32 %v572, %v837
    %v839 = vpop.f32.mrb[0].mxu0
    %v840 = vadd.f32 %v574, %v839
    %v841 = vpop.f32.mrb[0].mxu0
    %v842 = vadd.f32 %v576, %v841
    %v843 = vpop.f32.mrb[0].mxu0
    %v844 = vadd.f32 %v578, %v843
    %845 = vmatprep.mubr.bf16.mxu0 0
    %846 = vmatmul.mubr.bf16.gmra.mrb[0].mxu0 %v311
    %v847 = vpop.f32.mrb[0].mxu0
    %v848 = vadd.f32 %v582, %v847
    %v849 = vpop.f32.mrb[0].mxu0
    %v850 = vadd.f32 %v584, %v849
    %v851 = vpop.f32.mrb[0].mxu0
    %v852 = vadd.f32 %v586, %v851
    %v853 = vpop.f32.mrb[0].mxu0
    %v854 = vadd.f32 %v588, %v853
    %855 = vmatprep.mubr.bf16.mxu0 0
    %856 = vmatmul.mubr.bf16.gmra.mrb[0].mxu0 %v312
    %v857 = vpop.f32.mrb[0].mxu0
    %v858 = vadd.f32 %v592, %v857
    %v859 = vpop.f32.mrb[0].mxu0
    %v860 = vadd.f32 %v594, %v859
    %v861 = vpop.f32.mrb[0].mxu0
    %v862 = vadd.f32 %v596, %v861
    %v863 = vpop.f32.mrb[0].mxu0
    %v864 = vadd.f32 %v598, %v863
    %865 = vdwg.mxu0
    %866 = vmatprep.subr.bf16.mxu0 0
    %867 = vmatpush1.bf16.msra.mxu0 %v747
    %868 = vmatprep.subr.bf16.mxu0 0
    %869 = vmatpush1.bf16.msra.mxu0 %v750
    %870 = vmatprep.subr.bf16.mxu0 0
    %871 = vmatpush1.bf16.msra.mxu0 %v753
    %872 = vmatprep.subr.bf16.mxu0 0
    %873 = vmatpush1.bf16.msra.mxu0 %v756
    %874 = vmatprep.subr.bf16.mxu0 0
    %875 = vmatpush1.bf16.msra.mxu0 %v759
    %876 = vmatprep.subr.bf16.mxu0 0
    %877 = vmatpush1.bf16.msra.mxu0 %v762
    %878 = vmatprep.subr.bf16.mxu0 0
    %879 = vmatpush1.bf16.msra.mxu0 %v765
    %880 = vmatprep.subr.bf16.mxu0 0
    %881 = vmatpush1.bf16.msra.mxu0 %v768
    %882 = vmatprep.subr.bf16.mxu0 0
    %883 = vmatpush1.bf16.msra.mxu0 0
    %884 = vmatprep.subr.bf16.mxu0 0
    %885 = vmatpush1.bf16.msra.mxu0 0
    %886 = vmatprep.subr.bf16.mxu0 0
    %887 = vmatpush1.bf16.msra.mxu0 0
    %888 = vmatprep.subr.bf16.mxu0 0
    %889 = vmatpush1.bf16.msra.mxu0 0
    %890 = vmatprep.subr.bf16.mxu0 0
    %891 = vmatpush1.bf16.msra.mxu0 0
    %892 = vmatprep.subr.bf16.mxu0 0
    %893 = vmatpush1.bf16.msra.mxu0 0
    %894 = vmatprep.subr.bf16.mxu0 0
    %895 = vmatpush1.bf16.msra.mxu0 0
    %896 = vmatprep.subr.bf16.mxu0 0
    %897 = vmatpush1.bf16.msra.mxu0 0
    %898 = vmatprep.mubr.bf16.mxu0 0
    %899 = vmatmul.mubr.bf16.gmra.mrb[0].mxu0 %v309
    %v900 = vpop.f32.mrb[0].mxu0
    %v901 = vadd.f32 %v635, %v900
    %v902 = vpop.f32.mrb[0].mxu0
    %v903 = vpop.f32.mrb[0].mxu0
    %v904 = vadd.f32 %v638, %v903
    %v905 = vpop.f32.mrb[0].mxu0
    %906 = vmatprep.mubr.bf16.mxu0 0
    %907 = vmatmul.mubr.bf16.gmra.mrb[0].mxu0 %v310
    %v908 = vpop.f32.mrb[0].mxu0
    %v909 = vadd.f32 %v643, %v908
    %v910 = vpop.f32.mrb[0].mxu0
    %v911 = vpop.f32.mrb[0].mxu0
    %v912 = vadd.f32 %v646, %v911
    %v913 = vpop.f32.mrb[0].mxu0
    %914 = vmatprep.mubr.bf16.mxu0 0
    %915 = vmatmul.mubr.bf16.gmra.mrb[0].mxu0 %v311
    %v916 = vpop.f32.mrb[0].mxu0
    %v917 = vadd.f32 %v651, %v916
    %v918 = vpop.f32.mrb[0].mxu0
    %v919 = vpop.f32.mrb[0].mxu0
    %v920 = vadd.f32 %v654, %v919
    %v921 = vpop.f32.mrb[0].mxu0
    %922 = vmatprep.mubr.bf16.mxu0 0
    %923 = vmatmul.mubr.bf16.gmra.mrb[0].mxu0 %v312
    %v924 = vpop.f32.mrb[0].mxu0
    %v925 = vadd.f32 %v659, %v924
    %v926 = vpop.f32.mrb[0].mxu0
    %v927 = vpop.f32.mrb[0].mxu0
    %v928 = vadd.f32 %v662, %v927
    %v929 = vpop.f32.mrb[0].mxu0
    %930 = vdwg.mxu0
    %v932 = vlaneseq
    %v933 = vshrl.u32 %v932, 7
    %v934 = vsub.s32 0, %v933
    %v935 = vrot.slane %v125, %v934
    %v936 = vlaneseq
    %v937 = vshrl.u32 %v936, 7
    %v938 = vsub.s32 1, %v937
    %v939 = vrot.slane %v125, %v938
    %v940 = vlaneseq
    %v941 = vshrl.u32 %v940, 7
    %v942 = vsub.s32 2, %v941
    %v943 = vrot.slane %v125, %v942
    %v947 = vadd.f32 %v828, %v935
    %v948 = vadd.f32 %v830, %v939
    %v949 = vadd.f32 %v901, %v943
    %v950 = vadd.f32 %v832, %v935
    %v951 = vadd.f32 %v834, %v939
    %v952 = vadd.f32 %v904, %v943
    %v953 = vadd.f32 %v838, %v935
    %v954 = vadd.f32 %v840, %v939
    %v955 = vadd.f32 %v909, %v943
    %v956 = vadd.f32 %v842, %v935
    %v957 = vadd.f32 %v844, %v939
    %v958 = vadd.f32 %v912, %v943
    %v959 = vadd.f32 %v848, %v935
    %v960 = vadd.f32 %v850, %v939
    %v961 = vadd.f32 %v917, %v943
    %v962 = vadd.f32 %v852, %v935
    %v963 = vadd.f32 %v854, %v939
    %v964 = vadd.f32 %v920, %v943
    %v965 = vadd.f32 %v858, %v935
    %v966 = vadd.f32 %v860, %v939
    %v967 = vadd.f32 %v925, %v943
    %v968 = vadd.f32 %v862, %v935
    %v969 = vadd.f32 %v864, %v939
    %v970 = vadd.f32 %v928, %v943
    %v971 = vmax.f32 %v947, 0.0
    %v972 = vmax.f32 %v948, 0.0
    %v973 = vmax.f32 %v949, 0.0
    %v974 = vmax.f32 %v950, 0.0
    %v975 = vmax.f32 %v951, 0.0
    %v976 = vmax.f32 %v952, 0.0
    %v977 = vmax.f32 %v953, 0.0
    %v978 = vmax.f32 %v954, 0.0
    %v979 = vmax.f32 %v955, 0.0
    %v980 = vmax.f32 %v956, 0.0
    %v981 = vmax.f32 %v957, 0.0
    %v982 = vmax.f32 %v958, 0.0
    %v983 = vmax.f32 %v959, 0.0
    %v984 = vmax.f32 %v960, 0.0
    %v985 = vmax.f32 %v961, 0.0
    %v986 = vmax.f32 %v962, 0.0
    %v987 = vmax.f32 %v963, 0.0
    %v988 = vmax.f32 %v964, 0.0
    %v989 = vmax.f32 %v965, 0.0
    %v990 = vmax.f32 %v966, 0.0
    %v991 = vmax.f32 %v967, 0.0
    %v992 = vmax.f32 %v968, 0.0
    %v993 = vmax.f32 %v969, 0.0
    %v994 = vmax.f32 %v970, 0.0
    %v995 = vpack.c.bf16 %v974, %v971
    %v996 = vpack.c.bf16 %v975, %v972
    %v997 = vpack.c.bf16 %v976, %v973
    %v998 = vpack.c.bf16 %v980, %v977
    %v999 = vpack.c.bf16 %v981, %v978
    %v1000 = vpack.c.bf16 %v982, %v979
    %v1001 = vpack.c.bf16 %v986, %v983
    %v1002 = vpack.c.bf16 %v987, %v984
    %v1003 = vpack.c.bf16 %v988, %v985
    %v1004 = vpack.c.bf16 %v992, %v989
    %v1005 = vpack.c.bf16 %v993, %v990
    %v1006 = vpack.c.bf16 %v994, %v991
    %v1055 = vunpack.c.l.b16 %v126
    %v1056 = vunpack.c.h.b16 %v126
    %v1057 = vunpack.c.l.b16 %v127
    %v1058 = vunpack.c.h.b16 %v127
    %v1059 = vunpack.c.l.b16 %v128
    %v1060 = vunpack.c.h.b16 %v128
    %v1061 = vunpack.c.l.b16 %v129
    %v1062 = vunpack.c.h.b16 %v129
    %v1063 = vunpack.c.l.b16 %v130
    %v1064 = vunpack.c.h.b16 %v130
    %v1065 = vunpack.c.l.b16 %v131
    %v1066 = vunpack.c.h.b16 %v131
    %v1067 = vunpack.c.l.b16 %v132
    %v1068 = vunpack.c.h.b16 %v132
    %v1069 = vunpack.c.l.b16 %v133
    %v1070 = vunpack.c.h.b16 %v133
    %v1071 = vunpack.c.l.b16 %v134
    %v1072 = vunpack.c.h.b16 %v134
    %v1073 = vunpack.c.l.b16 %v135
    %v1074 = vunpack.c.h.b16 %v135
    %v1075 = vunpack.c.l.b16 %v136
    %v1076 = vunpack.c.h.b16 %v136
    %v1077 = vunpack.c.l.b16 %v137
    %v1078 = vunpack.c.h.b16 %v137
    %v1079 = vunpack.c.l.b16 %v138
    %v1080 = vunpack.c.h.b16 %v138
    %v1081 = vunpack.c.l.b16 %v139
    %v1082 = vunpack.c.h.b16 %v139
    %v1083 = vunpack.c.l.b16 %v140
    %v1084 = vunpack.c.h.b16 %v140
    %v1085 = vunpack.c.l.b16 %v141
    %v1086 = vunpack.c.h.b16 %v141
    %v1087 = vunpack.c.l.b16 %v142
    %v1088 = vunpack.c.h.b16 %v142
    %v1089 = vunpack.c.l.b16 %v143
    %v1090 = vunpack.c.h.b16 %v143
    %v1091 = vunpack.c.l.b16 %v144
    %v1092 = vunpack.c.h.b16 %v144
    %v1093 = vunpack.c.l.b16 %v145
    %v1094 = vunpack.c.h.b16 %v145
    %v1095 = vunpack.c.l.b16 %v146
    %v1096 = vunpack.c.h.b16 %v146
    %v1097 = vunpack.c.l.b16 %v147
    %v1098 = vunpack.c.h.b16 %v147
    %v1099 = vunpack.c.l.b16 %v148
    %v1100 = vunpack.c.h.b16 %v148
    %v1101 = vunpack.c.l.b16 %v149
    %v1102 = vunpack.c.h.b16 %v149
    %v1103 = vunpack.c.l.b16 %v150
    %v1104 = vunpack.c.h.b16 %v150
    %v1105 = vunpack.c.l.b16 %v151
    %v1106 = vunpack.c.h.b16 %v151
    %v1107 = vunpack.c.l.b16 %v152
    %v1108 = vunpack.c.h.b16 %v152
    %v1109 = vunpack.c.l.b16 %v153
    %v1110 = vunpack.c.h.b16 %v153
    %v1111 = vunpack.c.l.b16 %v154
    %v1112 = vunpack.c.h.b16 %v154
    %v1113 = vunpack.c.l.b16 %v155
    %v1114 = vunpack.c.h.b16 %v155
    %v1115 = vunpack.c.l.b16 %v156
    %v1116 = vunpack.c.h.b16 %v156
    %v1117 = vunpack.c.l.b16 %v157
    %v1118 = vunpack.c.h.b16 %v157
    %v1119 = vunpack.c.l.b16 %v158
    %v1120 = vunpack.c.h.b16 %v158
    %v1121 = vunpack.c.l.b16 %v159
    %v1122 = vunpack.c.h.b16 %v159
    %v1123 = vunpack.c.l.b16 %v160
    %v1124 = vunpack.c.h.b16 %v160
    %v1125 = vunpack.c.l.b16 %v161
    %v1126 = vunpack.c.h.b16 %v161
    %v1127 = vunpack.c.l.b16 %v162
    %v1128 = vunpack.c.h.b16 %v162
    %v1129 = vunpack.c.l.b16 %v163
    %v1130 = vunpack.c.h.b16 %v163
    %v1131 = vunpack.c.l.b16 %v164
    %v1132 = vunpack.c.h.b16 %v164
    %v1133 = vunpack.c.l.b16 %v165
    %v1134 = vunpack.c.h.b16 %v165
    %v1135 = vunpack.c.l.b16 %v166
    %v1136 = vunpack.c.h.b16 %v166
    %v1137 = vunpack.c.l.b16 %v167
    %v1138 = vunpack.c.h.b16 %v167
    %v1139 = vunpack.c.l.b16 %v168
    %v1140 = vunpack.c.h.b16 %v168
    %v1141 = vunpack.c.l.b16 %v169
    %v1142 = vunpack.c.h.b16 %v169
    %v1143 = vunpack.c.l.b16 %v170
    %v1144 = vunpack.c.h.b16 %v170
    %v1145 = vunpack.c.l.b16 %v171
    %v1146 = vunpack.c.h.b16 %v171
    %v1147 = vunpack.c.l.b16 %v172
    %v1148 = vunpack.c.h.b16 %v172
    %v1149 = vunpack.c.l.b16 %v173
    %v1150 = vunpack.c.h.b16 %v173
    %v1151 = vpack.c.b16 %v1057, %v1055
    %v1152 = vpack.c.b16 %v1058, %v1056
    %v1153 = vpack.c.b16 %v1061, %v1059
    %v1154 = vpack.c.b16 %v1062, %v1060
    %v1155 = vpack.c.b16 %v1065, %v1063
    %v1156 = vpack.c.b16 %v1066, %v1064
    %v1157 = vpack.c.b16 %v1069, %v1067
    %v1158 = vpack.c.b16 %v1070, %v1068
    %v1159 = vpack.c.b16 %v1073, %v1071
    %v1160 = vpack.c.b16 %v1074, %v1072
    %v1161 = vpack.c.b16 %v1077, %v1075
    %v1162 = vpack.c.b16 %v1078, %v1076
    %v1163 = vpack.c.b16 %v1081, %v1079
    %v1164 = vpack.c.b16 %v1082, %v1080
    %v1165 = vpack.c.b16 %v1085, %v1083
    %v1166 = vpack.c.b16 %v1086, %v1084
    %v1167 = vpack.c.b16 %v1089, %v1087
    %v1168 = vpack.c.b16 %v1090, %v1088
    %v1169 = vpack.c.b16 %v1093, %v1091
    %v1170 = vpack.c.b16 %v1094, %v1092
    %v1171 = vpack.c.b16 %v1097, %v1095
    %v1172 = vpack.c.b16 %v1098, %v1096
    %v1173 = vpack.c.b16 %v1101, %v1099
    %v1174 = vpack.c.b16 %v1102, %v1100
    %v1175 = vpack.c.b16 %v1105, %v1103
    %v1176 = vpack.c.b16 %v1106, %v1104
    %v1177 = vpack.c.b16 %v1109, %v1107
    %v1178 = vpack.c.b16 %v1110, %v1108
    %v1179 = vpack.c.b16 %v1113, %v1111
    %v1180 = vpack.c.b16 %v1114, %v1112
    %v1181 = vpack.c.b16 %v1117, %v1115
    %v1182 = vpack.c.b16 %v1118, %v1116
    %v1183 = vpack.c.b16 %v1121, %v1119
    %v1184 = vpack.c.b16 %v1122, %v1120
    %v1185 = vpack.c.b16 %v1125, %v1123
    %v1186 = vpack.c.b16 %v1126, %v1124
    %v1187 = vpack.c.b16 %v1129, %v1127
    %v1188 = vpack.c.b16 %v1130, %v1128
    %v1189 = vpack.c.b16 %v1133, %v1131
    %v1190 = vpack.c.b16 %v1134, %v1132
    %v1191 = vpack.c.b16 %v1137, %v1135
    %v1192 = vpack.c.b16 %v1138, %v1136
    %v1193 = vpack.c.b16 %v1141, %v1139
    %v1194 = vpack.c.b16 %v1142, %v1140
    %v1195 = vpack.c.b16 %v1145, %v1143
    %v1196 = vpack.c.b16 %v1146, %v1144
    %v1197 = vpack.c.b16 %v1149, %v1147
    %v1198 = vpack.c.b16 %v1150, %v1148
    %1247 = vmatprep.subr.bf16.mxu0 %v1152
    %1248 = vmatpush1.bf16.msra.mxu0 %v1151
    %1249 = vmatprep.subr.bf16.mxu0 %v1154
    %1250 = vmatpush1.bf16.msra.mxu0 %v1153
    %1251 = vmatprep.subr.bf16.mxu0 %v1156
    %1252 = vmatpush1.bf16.msra.mxu0 %v1155
    %1253 = vmatprep.subr.bf16.mxu0 %v1158
    %1254 = vmatpush1.bf16.msra.mxu0 %v1157
    %1255 = vmatprep.subr.bf16.mxu0 %v1160
    %1256 = vmatpush1.bf16.msra.mxu0 %v1159
    %1257 = vmatprep.subr.bf16.mxu0 %v1162
    %1258 = vmatpush1.bf16.msra.mxu0 %v1161
    %1259 = vmatprep.subr.bf16.mxu0 %v1164
    %1260 = vmatpush1.bf16.msra.mxu0 %v1163
    %1261 = vmatprep.subr.bf16.mxu0 %v1166
    %1262 = vmatpush1.bf16.msra.mxu0 %v1165
    %1263 = vmatprep.subr.bf16.mxu0 %v1168
    %1264 = vmatpush1.bf16.msra.mxu0 %v1167
    %1265 = vmatprep.subr.bf16.mxu0 %v1170
    %1266 = vmatpush1.bf16.msra.mxu0 %v1169
    %1267 = vmatprep.subr.bf16.mxu0 %v1172
    %1268 = vmatpush1.bf16.msra.mxu0 %v1171
    %1269 = vmatprep.subr.bf16.mxu0 %v1174
    %1270 = vmatpush1.bf16.msra.mxu0 %v1173
    %1271 = vmatprep.subr.bf16.mxu0 %v1176
    %1272 = vmatpush1.bf16.msra.mxu0 %v1175
    %1273 = vmatprep.subr.bf16.mxu0 %v1178
    %1274 = vmatpush1.bf16.msra.mxu0 %v1177
    %1275 = vmatprep.subr.bf16.mxu0 %v1180
    %1276 = vmatpush1.bf16.msra.mxu0 %v1179
    %1277 = vmatprep.subr.bf16.mxu0 %v1182
    %1278 = vmatpush1.bf16.msra.mxu0 %v1181
    %1279 = vmatprep.mubr.bf16.mxu0 %v996
    %1280 = vmatmul.mubr.bf16.gmra.mrb[0].mxu0 %v995
    %v1281 = vpop.f32.mrb[0].mxu0
    %v1282 = vadd.f32 0.0, %v1281
    %v1283 = vpop.f32.mrb[0].mxu0
    %v1284 = vadd.f32 0.0, %v1283
    %v1285 = vpop.f32.mrb[0].mxu0
    %v1286 = vadd.f32 0.0, %v1285
    %v1287 = vpop.f32.mrb[0].mxu0
    %v1288 = vadd.f32 0.0, %v1287
    %1289 = vmatprep.mubr.bf16.mxu0 %v999
    %1290 = vmatmul.mubr.bf16.gmra.mrb[0].mxu0 %v998
    %v1291 = vpop.f32.mrb[0].mxu0
    %v1292 = vadd.f32 0.0, %v1291
    %v1293 = vpop.f32.mrb[0].mxu0
    %v1294 = vadd.f32 0.0, %v1293
    %v1295 = vpop.f32.mrb[0].mxu0
    %v1296 = vadd.f32 0.0, %v1295
    %v1297 = vpop.f32.mrb[0].mxu0
    %v1298 = vadd.f32 0.0, %v1297
    %1299 = vmatprep.mubr.bf16.mxu0 %v1002
    %1300 = vmatmul.mubr.bf16.gmra.mrb[0].mxu0 %v1001
    %v1301 = vpop.f32.mrb[0].mxu0
    %v1302 = vadd.f32 0.0, %v1301
    %v1303 = vpop.f32.mrb[0].mxu0
    %v1304 = vadd.f32 0.0, %v1303
    %v1305 = vpop.f32.mrb[0].mxu0
    %v1306 = vadd.f32 0.0, %v1305
    %v1307 = vpop.f32.mrb[0].mxu0
    %v1308 = vadd.f32 0.0, %v1307
    %1309 = vmatprep.mubr.bf16.mxu0 %v1005
    %1310 = vmatmul.mubr.bf16.gmra.mrb[0].mxu0 %v1004
    %v1311 = vpop.f32.mrb[0].mxu0
    %v1312 = vadd.f32 0.0, %v1311
    %v1313 = vpop.f32.mrb[0].mxu0
    %v1314 = vadd.f32 0.0, %v1313
    %v1315 = vpop.f32.mrb[0].mxu0
    %v1316 = vadd.f32 0.0, %v1315
    %v1317 = vpop.f32.mrb[0].mxu0
    %v1318 = vadd.f32 0.0, %v1317
    %1319 = vdwg.mxu0
    %1320 = vmatprep.subr.bf16.mxu0 %v1184
    %1321 = vmatpush1.bf16.msra.mxu0 %v1183
    %1322 = vmatprep.subr.bf16.mxu0 %v1186
    %1323 = vmatpush1.bf16.msra.mxu0 %v1185
    %1324 = vmatprep.subr.bf16.mxu0 %v1188
    %1325 = vmatpush1.bf16.msra.mxu0 %v1187
    %1326 = vmatprep.subr.bf16.mxu0 %v1190
    %1327 = vmatpush1.bf16.msra.mxu0 %v1189
    %1328 = vmatprep.subr.bf16.mxu0 %v1192
    %1329 = vmatpush1.bf16.msra.mxu0 %v1191
    %1330 = vmatprep.subr.bf16.mxu0 %v1194
    %1331 = vmatpush1.bf16.msra.mxu0 %v1193
    %1332 = vmatprep.subr.bf16.mxu0 %v1196
    %1333 = vmatpush1.bf16.msra.mxu0 %v1195
    %1334 = vmatprep.subr.bf16.mxu0 %v1198
    %1335 = vmatpush1.bf16.msra.mxu0 %v1197
    %1336 = vmatprep.subr.bf16.mxu0 0
    %1337 = vmatpush1.bf16.msra.mxu0 0
    %1338 = vmatprep.subr.bf16.mxu0 0
    %1339 = vmatpush1.bf16.msra.mxu0 0
    %1340 = vmatprep.subr.bf16.mxu0 0
    %1341 = vmatpush1.bf16.msra.mxu0 0
    %1342 = vmatprep.subr.bf16.mxu0 0
    %1343 = vmatpush1.bf16.msra.mxu0 0
    %1344 = vmatprep.subr.bf16.mxu0 0
    %1345 = vmatpush1.bf16.msra.mxu0 0
    %1346 = vmatprep.subr.bf16.mxu0 0
    %1347 = vmatpush1.bf16.msra.mxu0 0
    %1348 = vmatprep.subr.bf16.mxu0 0
    %1349 = vmatpush1.bf16.msra.mxu0 0
    %1350 = vmatprep.subr.bf16.mxu0 0
    %1351 = vmatpush1.bf16.msra.mxu0 0
    %1352 = vmatprep.mubr.bf16.mxu0 0
    %1353 = vmatmul.mubr.bf16.gmra.mrb[0].mxu0 %v997
    %v1354 = vpop.f32.mrb[0].mxu0
    %v1355 = vadd.f32 %v1282, %v1354
    %v1356 = vpop.f32.mrb[0].mxu0
    %v1357 = vadd.f32 %v1284, %v1356
    %v1358 = vpop.f32.mrb[0].mxu0
    %v1359 = vadd.f32 %v1286, %v1358
    %v1360 = vpop.f32.mrb[0].mxu0
    %v1361 = vadd.f32 %v1288, %v1360
    %1362 = vmatprep.mubr.bf16.mxu0 0
    %1363 = vmatmul.mubr.bf16.gmra.mrb[0].mxu0 %v1000
    %v1364 = vpop.f32.mrb[0].mxu0
    %v1365 = vadd.f32 %v1292, %v1364
    %v1366 = vpop.f32.mrb[0].mxu0
    %v1367 = vadd.f32 %v1294, %v1366
    %v1368 = vpop.f32.mrb[0].mxu0
    %v1369 = vadd.f32 %v1296, %v1368
    %v1370 = vpop.f32.mrb[0].mxu0
    %v1371 = vadd.f32 %v1298, %v1370
    %1372 = vmatprep.mubr.bf16.mxu0 0
    %1373 = vmatmul.mubr.bf16.gmra.mrb[0].mxu0 %v1003
    %v1374 = vpop.f32.mrb[0].mxu0
    %v1375 = vadd.f32 %v1302, %v1374
    %v1376 = vpop.f32.mrb[0].mxu0
    %v1377 = vadd.f32 %v1304, %v1376
    %v1378 = vpop.f32.mrb[0].mxu0
    %v1379 = vadd.f32 %v1306, %v1378
    %v1380 = vpop.f32.mrb[0].mxu0
    %v1381 = vadd.f32 %v1308, %v1380
    %1382 = vmatprep.mubr.bf16.mxu0 0
    %1383 = vmatmul.mubr.bf16.gmra.mrb[0].mxu0 %v1006
    %v1384 = vpop.f32.mrb[0].mxu0
    %v1385 = vadd.f32 %v1312, %v1384
    %v1386 = vpop.f32.mrb[0].mxu0
    %v1387 = vadd.f32 %v1314, %v1386
    %v1388 = vpop.f32.mrb[0].mxu0
    %v1389 = vadd.f32 %v1316, %v1388
    %v1390 = vpop.f32.mrb[0].mxu0
    %v1391 = vadd.f32 %v1318, %v1390
    %1392 = vdwg.mxu0
    %v1393 = vpack.c.bf16 %v1361, %v1357
    %v1394 = vpack.c.bf16 %v1371, %v1367
    %v1395 = vpack.c.bf16 %v1381, %v1377
    %v1396 = vpack.c.bf16 %v1391, %v1387
    %1397 = vmatprep.subr.bf16.mxu0 0
    %1398 = vmatpush1.bf16.msra.mxu0 %v1393
    %1399 = vmatprep.subr.bf16.mxu0 0
    %1400 = vmatpush1.bf16.msra.mxu0 %v1394
    %1401 = vmatprep.subr.bf16.mxu0 0
    %1402 = vmatpush1.bf16.msra.mxu0 %v1395
    %1403 = vmatprep.subr.bf16.mxu0 0
    %1404 = vmatpush1.bf16.msra.mxu0 %v1396
    %1405 = vmatprep.subr.bf16.mxu0 0
    %1406 = vmatpush1.bf16.msra.mxu0 0
    %1407 = vmatprep.subr.bf16.mxu0 0
    %1408 = vmatpush1.bf16.msra.mxu0 0
    %1409 = vmatprep.subr.bf16.mxu0 0
    %1410 = vmatpush1.bf16.msra.mxu0 0
    %1411 = vmatprep.subr.bf16.mxu0 0
    %1412 = vmatpush1.bf16.msra.mxu0 0
    %1413 = vmatprep.subr.bf16.mxu0 0
    %1414 = vmatpush1.bf16.msra.mxu0 0
    %1415 = vmatprep.subr.bf16.mxu0 0
    %1416 = vmatpush1.bf16.msra.mxu0 0
    %1417 = vmatprep.subr.bf16.mxu0 0
    %1418 = vmatpush1.bf16.msra.mxu0 0
    %1419 = vmatprep.subr.bf16.mxu0 0
    %1420 = vmatpush1.bf16.msra.mxu0 0
    %1421 = vmatprep.subr.bf16.mxu0 0
    %1422 = vmatpush1.bf16.msra.mxu0 0
    %1423 = vmatprep.subr.bf16.mxu0 0
    %1424 = vmatpush1.bf16.msra.mxu0 0
    %1425 = vmatprep.subr.bf16.mxu0 0
    %1426 = vmatpush1.bf16.msra.mxu0 0
    %1427 = vmatprep.subr.bf16.mxu0 0
    %1428 = vmatpush1.bf16.msra.mxu0 0
    %1429 = vmatprep.mubr.bf16.mxu0 0
    %1430 = vmatmul.mubr.bf16.gmra.mrb[0].mxu0 %v319
    %v1431 = vpop.f32.mrb[0].mxu0
    %v1432 = vadd.f32 0.0, %v1431
    %v1433 = vpop.f32.mrb[0].mxu0
    %v1434 = vpop.f32.mrb[0].mxu0
    %v1435 = vadd.f32 0.0, %v1434
    %v1436 = vpop.f32.mrb[0].mxu0
    %1437 = vmatprep.mubr.bf16.mxu0 0
    %1438 = vmatmul.mubr.bf16.gmra.mrb[0].mxu0 %v322
    %v1439 = vpop.f32.mrb[0].mxu0
    %v1440 = vadd.f32 0.0, %v1439
    %v1441 = vpop.f32.mrb[0].mxu0
    %v1442 = vpop.f32.mrb[0].mxu0
    %v1443 = vadd.f32 0.0, %v1442
    %v1444 = vpop.f32.mrb[0].mxu0
    %1445 = vmatprep.mubr.bf16.mxu0 0
    %1446 = vmatmul.mubr.bf16.gmra.mrb[0].mxu0 %v325
    %v1447 = vpop.f32.mrb[0].mxu0
    %v1448 = vadd.f32 0.0, %v1447
    %v1449 = vpop.f32.mrb[0].mxu0
    %v1450 = vpop.f32.mrb[0].mxu0
    %v1451 = vadd.f32 0.0, %v1450
    %v1452 = vpop.f32.mrb[0].mxu0
    %1453 = vmatprep.mubr.bf16.mxu0 0
    %1454 = vmatmul.mubr.bf16.gmra.mrb[0].mxu0 %v328
    %v1455 = vpop.f32.mrb[0].mxu0
    %v1456 = vadd.f32 0.0, %v1455
    %v1457 = vpop.f32.mrb[0].mxu0
    %v1458 = vpop.f32.mrb[0].mxu0
    %v1459 = vadd.f32 0.0, %v1458
    %v1460 = vpop.f32.mrb[0].mxu0
    %1461 = vdwg.mxu0
    %v1462 = vadd.f32 %v1355, %v1432
    %v1463 = vadd.f32 %v1359, %v1435
    %v1464 = vadd.f32 %v1365, %v1440
    %v1465 = vadd.f32 %v1369, %v1443
    %v1466 = vadd.f32 %v1375, %v1448
    %v1467 = vadd.f32 %v1379, %v1451
    %v1468 = vadd.f32 %v1385, %v1456
    %v1469 = vadd.f32 %v1389, %v1459
    %v1471 = vlaneseq
    %v1472 = vshrl.u32 %v1471, 7
    %v1473 = vsub.s32 0, %v1472
    %v1474 = vrot.slane %v174, %v1473
    %v1476 = vadd.f32 %v1462, %v1474
    %v1477 = vadd.f32 %v1463, %v1474
    %v1478 = vadd.f32 %v1464, %v1474
    %v1479 = vadd.f32 %v1465, %v1474
    %v1480 = vadd.f32 %v1466, %v1474
    %v1481 = vadd.f32 %v1467, %v1474
    %v1482 = vadd.f32 %v1468, %v1474
    %v1483 = vadd.f32 %v1469, %v1474
    %v1484 = vmax.f32 %v1476, 0.0
    %v1485 = vmax.f32 %v1477, 0.0
    %v1486 = vmax.f32 %v1478, 0.0
    %v1487 = vmax.f32 %v1479, 0.0
    %v1488 = vmax.f32 %v1480, 0.0
    %v1489 = vmax.f32 %v1481, 0.0
    %v1490 = vmax.f32 %v1482, 0.0
    %v1491 = vmax.f32 %v1483, 0.0
    %v1493 = vlaneseq
    %v1494 = vshrl.u32 %v1493, 7
    %v1495 = vsub.s32 0, %v1494
    %v1496 = vrot.slane %v208, %v1495
    %v1497 = vlaneseq
    %v1498 = vshrl.u32 %v1497, 7
    %v1499 = vsub.s32 1, %v1498
    %v1500 = vrot.slane %v208, %v1499
    %v1519 = vunpack.c.l.b16 %v192
    %v1520 = vunpack.c.h.b16 %v192
    %v1521 = vunpack.c.l.b16 %v193
    %v1522 = vunpack.c.h.b16 %v193
    %v1523 = vunpack.c.l.b16 %v194
    %v1524 = vunpack.c.h.b16 %v194
    %v1525 = vunpack.c.l.b16 %v195
    %v1526 = vunpack.c.h.b16 %v195
    %v1527 = vunpack.c.l.b16 %v196
    %v1528 = vunpack.c.h.b16 %v196
    %v1529 = vunpack.c.l.b16 %v197
    %v1530 = vunpack.c.h.b16 %v197
    %v1531 = vunpack.c.l.b16 %v198
    %v1532 = vunpack.c.h.b16 %v198
    %v1533 = vunpack.c.l.b16 %v199
    %v1534 = vunpack.c.h.b16 %v199
    %v1535 = vunpack.c.l.b16 %v200
    %v1536 = vunpack.c.h.b16 %v200
    %v1537 = vunpack.c.l.b16 %v201
    %v1538 = vunpack.c.h.b16 %v201
    %v1539 = vunpack.c.l.b16 %v202
    %v1540 = vunpack.c.h.b16 %v202
    %v1541 = vunpack.c.l.b16 %v203
    %v1542 = vunpack.c.h.b16 %v203
    %v1543 = vunpack.c.l.b16 %v204
    %v1544 = vunpack.c.h.b16 %v204
    %v1545 = vunpack.c.l.b16 %v205
    %v1546 = vunpack.c.h.b16 %v205
    %v1547 = vunpack.c.l.b16 %v206
    %v1548 = vunpack.c.h.b16 %v206
    %v1549 = vunpack.c.l.b16 %v207
    %v1550 = vunpack.c.h.b16 %v207
    %v1551 = vpack.c.b16 %v1521, %v1519
    %v1552 = vpack.c.b16 %v1522, %v1520
    %v1553 = vpack.c.b16 %v1525, %v1523
    %v1554 = vpack.c.b16 %v1526, %v1524
    %v1555 = vpack.c.b16 %v1529, %v1527
    %v1556 = vpack.c.b16 %v1530, %v1528
    %v1557 = vpack.c.b16 %v1533, %v1531
    %v1558 = vpack.c.b16 %v1534, %v1532
    %v1559 = vpack.c.b16 %v1537, %v1535
    %v1560 = vpack.c.b16 %v1538, %v1536
    %v1561 = vpack.c.b16 %v1541, %v1539
    %v1562 = vpack.c.b16 %v1542, %v1540
    %v1563 = vpack.c.b16 %v1545, %v1543
    %v1564 = vpack.c.b16 %v1546, %v1544
    %v1565 = vpack.c.b16 %v1549, %v1547
    %v1566 = vpack.c.b16 %v1550, %v1548
    %1583 = vmatprep.subr.bf16.mxu0 %v1552
    %1584 = vmatpush1.bf16.msra.mxu0 %v1551
    %1585 = vmatprep.subr.bf16.mxu0 %v1554
    %1586 = vmatpush1.bf16.msra.mxu0 %v1553
    %1587 = vmatprep.subr.bf16.mxu0 %v1556
    %1588 = vmatpush1.bf16.msra.mxu0 %v1555
    %1589 = vmatprep.subr.bf16.mxu0 %v1558
    %1590 = vmatpush1.bf16.msra.mxu0 %v1557
    %1591 = vmatprep.subr.bf16.mxu0 %v1560
    %1592 = vmatpush1.bf16.msra.mxu0 %v1559
    %1593 = vmatprep.subr.bf16.mxu0 %v1562
    %1594 = vmatpush1.bf16.msra.mxu0 %v1561
    %1595 = vmatprep.subr.bf16.mxu0 %v1564
    %1596 = vmatpush1.bf16.msra.mxu0 %v1563
    %1597 = vmatprep.subr.bf16.mxu0 %v1566
    %1598 = vmatpush1.bf16.msra.mxu0 %v1565
    %1599 = vmatprep.subr.bf16.mxu0 0
    %1600 = vmatpush1.bf16.msra.mxu0 0
    %1601 = vmatprep.subr.bf16.mxu0 0
    %1602 = vmatpush1.bf16.msra.mxu0 0
    %1603 = vmatprep.subr.bf16.mxu0 0
    %1604 = vmatpush1.bf16.msra.mxu0 0
    %1605 = vmatprep.subr.bf16.mxu0 0
    %1606 = vmatpush1.bf16.msra.mxu0 0
    %1607 = vmatprep.subr.bf16.mxu0 0
    %1608 = vmatpush1.bf16.msra.mxu0 0
    %1609 = vmatprep.subr.bf16.mxu0 0
    %1610 = vmatpush1.bf16.msra.mxu0 0
    %1611 = vmatprep.subr.bf16.mxu0 0
    %1612 = vmatpush1.bf16.msra.mxu0 0
    %1613 = vmatprep.subr.bf16.mxu0 0
    %1614 = vmatpush1.bf16.msra.mxu0 0
    %1615 = vmatprep.mubr.bf16.mxu0 0
    %1616 = vmatmul.mubr.bf16.gmra.mrb[0].mxu0 %v309
    %v1617 = vpop.f32.mrb[0].mxu0
    %v1618 = vadd.f32 %v1496, %v1617
    %v1619 = vpop.f32.mrb[0].mxu0
    %v1620 = vadd.f32 %v1500, %v1619
    %v1621 = vpop.f32.mrb[0].mxu0
    %v1622 = vadd.f32 %v1496, %v1621
    %v1623 = vpop.f32.mrb[0].mxu0
    %v1624 = vadd.f32 %v1500, %v1623
    %1625 = vmatprep.mubr.bf16.mxu0 0
    %1626 = vmatmul.mubr.bf16.gmra.mrb[0].mxu0 %v310
    %v1627 = vpop.f32.mrb[0].mxu0
    %v1628 = vadd.f32 %v1496, %v1627
    %v1629 = vpop.f32.mrb[0].mxu0
    %v1630 = vadd.f32 %v1500, %v1629
    %v1631 = vpop.f32.mrb[0].mxu0
    %v1632 = vadd.f32 %v1496, %v1631
    %v1633 = vpop.f32.mrb[0].mxu0
    %v1634 = vadd.f32 %v1500, %v1633
    %1635 = vmatprep.mubr.bf16.mxu0 0
    %1636 = vmatmul.mubr.bf16.gmra.mrb[0].mxu0 %v311
    %v1637 = vpop.f32.mrb[0].mxu0
    %v1638 = vadd.f32 %v1496, %v1637
    %v1639 = vpop.f32.mrb[0].mxu0
    %v1640 = vadd.f32 %v1500, %v1639
    %v1641 = vpop.f32.mrb[0].mxu0
    %v1642 = vadd.f32 %v1496, %v1641
    %v1643 = vpop.f32.mrb[0].mxu0
    %v1644 = vadd.f32 %v1500, %v1643
    %1645 = vmatprep.mubr.bf16.mxu0 0
    %1646 = vmatmul.mubr.bf16.gmra.mrb[0].mxu0 %v312
    %v1647 = vpop.f32.mrb[0].mxu0
    %v1648 = vadd.f32 %v1496, %v1647
    %v1649 = vpop.f32.mrb[0].mxu0
    %v1650 = vadd.f32 %v1500, %v1649
    %v1651 = vpop.f32.mrb[0].mxu0
    %v1652 = vadd.f32 %v1496, %v1651
    %v1653 = vpop.f32.mrb[0].mxu0
    %v1654 = vadd.f32 %v1500, %v1653
    %1655 = vdwg.mxu0
    %v1656 = vmax.f32 %v1618, 0.0
    %v1657 = vmax.f32 %v1620, 0.0
    %v1658 = vmax.f32 %v1622, 0.0
    %v1659 = vmax.f32 %v1624, 0.0
    %v1660 = vmax.f32 %v1628, 0.0
    %v1661 = vmax.f32 %v1630, 0.0
    %v1662 = vmax.f32 %v1632, 0.0
    %v1663 = vmax.f32 %v1634, 0.0
    %v1664 = vmax.f32 %v1638, 0.0
    %v1665 = vmax.f32 %v1640, 0.0
    %v1666 = vmax.f32 %v1642, 0.0
    %v1667 = vmax.f32 %v1644, 0.0
    %v1668 = vmax.f32 %v1648, 0.0
    %v1669 = vmax.f32 %v1650, 0.0
    %v1670 = vmax.f32 %v1652, 0.0
    %v1671 = vmax.f32 %v1654, 0.0
    %v1672 = vadd.f32 %v1484, %v1656
    %v1673 = vadd.f32 %v1485, %v1658
    %v1674 = vadd.f32 %v1486, %v1660
    %v1675 = vadd.f32 %v1487, %v1662
    %v1676 = vadd.f32 %v1488, %v1664
    %v1677 = vadd.f32 %v1489, %v1666
    %v1678 = vadd.f32 %v1490, %v1668
    %v1679 = vadd.f32 %v1491, %v1670
    %v1680 = vadd.f32 %v1484, %v1657
    %v1681 = vadd.f32 %v1485, %v1659
    %v1682 = vadd.f32 %v1486, %v1661
    %v1683 = vadd.f32 %v1487, %v1663
    %v1684 = vadd.f32 %v1488, %v1665
    %v1685 = vadd.f32 %v1489, %v1667
    %v1686 = vadd.f32 %v1490, %v1669
    %v1687 = vadd.f32 %v1491, %v1671
    %v1688 = vpack.c.bf16 %v1673, %v1672
    %v1689 = vpack.c.bf16 %v1675, %v1674
    %v1690 = vpack.c.bf16 %v1677, %v1676
    %v1691 = vpack.c.bf16 %v1679, %v1678
    %v1708 = vunpack.c.l.b16 %v175
    %v1709 = vunpack.c.h.b16 %v175
    %v1710 = vunpack.c.l.b16 %v176
    %v1711 = vunpack.c.h.b16 %v176
    %v1712 = vunpack.c.l.b16 %v177
    %v1713 = vunpack.c.h.b16 %v177
    %v1714 = vunpack.c.l.b16 %v178
    %v1715 = vunpack.c.h.b16 %v178
    %v1716 = vunpack.c.l.b16 %v179
    %v1717 = vunpack.c.h.b16 %v179
    %v1718 = vunpack.c.l.b16 %v180
    %v1719 = vunpack.c.h.b16 %v180
    %v1720 = vunpack.c.l.b16 %v181
    %v1721 = vunpack.c.h.b16 %v181
    %v1722 = vunpack.c.l.b16 %v182
    %v1723 = vunpack.c.h.b16 %v182
    %v1724 = vunpack.c.l.b16 %v183
    %v1725 = vunpack.c.h.b16 %v183
    %v1726 = vunpack.c.l.b16 %v184
    %v1727 = vunpack.c.h.b16 %v184
    %v1728 = vunpack.c.l.b16 %v185
    %v1729 = vunpack.c.h.b16 %v185
    %v1730 = vunpack.c.l.b16 %v186
    %v1731 = vunpack.c.h.b16 %v186
    %v1732 = vunpack.c.l.b16 %v187
    %v1733 = vunpack.c.h.b16 %v187
    %v1734 = vunpack.c.l.b16 %v188
    %v1735 = vunpack.c.h.b16 %v188
    %v1736 = vunpack.c.l.b16 %v189
    %v1737 = vunpack.c.h.b16 %v189
    %v1738 = vunpack.c.l.b16 %v190
    %v1739 = vunpack.c.h.b16 %v190
    %v1740 = vpack.c.b16 %v1710, %v1708
    %v1741 = vpack.c.b16 %v1711, %v1709
    %v1742 = vpack.c.b16 %v1714, %v1712
    %v1743 = vpack.c.b16 %v1715, %v1713
    %v1744 = vpack.c.b16 %v1718, %v1716
    %v1745 = vpack.c.b16 %v1719, %v1717
    %v1746 = vpack.c.b16 %v1722, %v1720
    %v1747 = vpack.c.b16 %v1723, %v1721
    %v1748 = vpack.c.b16 %v1726, %v1724
    %v1749 = vpack.c.b16 %v1727, %v1725
    %v1750 = vpack.c.b16 %v1730, %v1728
    %v1751 = vpack.c.b16 %v1731, %v1729
    %v1752 = vpack.c.b16 %v1734, %v1732
    %v1753 = vpack.c.b16 %v1735, %v1733
    %v1754 = vpack.c.b16 %v1738, %v1736
    %v1755 = vpack.c.b16 %v1739, %v1737
    %1772 = vmatprep.subr.bf16.mxu0 %v1741
    %1773 = vmatpush1.bf16.msra.mxu0 %v1740
    %1774 = vmatprep.subr.bf16.mxu0 %v1743
    %1775 = vmatpush1.bf16.msra.mxu0 %v1742
    %1776 = vmatprep.subr.bf16.mxu0 %v1745
    %1777 = vmatpush1.bf16.msra.mxu0 %v1744
    %1778 = vmatprep.subr.bf16.mxu0 %v1747
    %1779 = vmatpush1.bf16.msra.mxu0 %v1746
    %1780 = vmatprep.subr.bf16.mxu0 %v1749
    %1781 = vmatpush1.bf16.msra.mxu0 %v1748
    %1782 = vmatprep.subr.bf16.mxu0 %v1751
    %1783 = vmatpush1.bf16.msra.mxu0 %v1750
    %1784 = vmatprep.subr.bf16.mxu0 %v1753
    %1785 = vmatpush1.bf16.msra.mxu0 %v1752
    %1786 = vmatprep.subr.bf16.mxu0 %v1755
    %1787 = vmatpush1.bf16.msra.mxu0 %v1754
    %1788 = vmatprep.subr.bf16.mxu0 0
    %1789 = vmatpush1.bf16.msra.mxu0 0
    %1790 = vmatprep.subr.bf16.mxu0 0
    %1791 = vmatpush1.bf16.msra.mxu0 0
    %1792 = vmatprep.subr.bf16.mxu0 0
    %1793 = vmatpush1.bf16.msra.mxu0 0
    %1794 = vmatprep.subr.bf16.mxu0 0
    %1795 = vmatpush1.bf16.msra.mxu0 0
    %1796 = vmatprep.subr.bf16.mxu0 0
    %1797 = vmatpush1.bf16.msra.mxu0 0
    %1798 = vmatprep.subr.bf16.mxu0 0
    %1799 = vmatpush1.bf16.msra.mxu0 0
    %1800 = vmatprep.subr.bf16.mxu0 0
    %1801 = vmatpush1.bf16.msra.mxu0 0
    %1802 = vmatprep.subr.bf16.mxu0 0
    %1803 = vmatpush1.bf16.msra.mxu0 0
    %1804 = vmatprep.mubr.bf16.mxu0 0
    %1805 = vmatmul.mubr.bf16.gmra.mrb[0].mxu0 %v1688
    %v1806 = vpop.f32.mrb[0].mxu0
    %v1807 = vadd.f32 0.0, %v1806
    %v1808 = vpop.f32.mrb[0].mxu0
    %v1809 = vadd.f32 0.0, %v1808
    %v1810 = vpop.f32.mrb[0].mxu0
    %v1811 = vadd.f32 0.0, %v1810
    %v1812 = vpop.f32.mrb[0].mxu0
    %v1813 = vadd.f32 0.0, %v1812
    %1814 = vmatprep.mubr.bf16.mxu0 0
    %1815 = vmatmul.mubr.bf16.gmra.mrb[0].mxu0 %v1689
    %v1816 = vpop.f32.mrb[0].mxu0
    %v1817 = vadd.f32 0.0, %v1816
    %v1818 = vpop.f32.mrb[0].mxu0
    %v1819 = vadd.f32 0.0, %v1818
    %v1820 = vpop.f32.mrb[0].mxu0
    %v1821 = vadd.f32 0.0, %v1820
    %v1822 = vpop.f32.mrb[0].mxu0
    %v1823 = vadd.f32 0.0, %v1822
    %1824 = vmatprep.mubr.bf16.mxu0 0
    %1825 = vmatmul.mubr.bf16.gmra.mrb[0].mxu0 %v1690
    %v1826 = vpop.f32.mrb[0].mxu0
    %v1827 = vadd.f32 0.0, %v1826
    %v1828 = vpop.f32.mrb[0].mxu0
    %v1829 = vadd.f32 0.0, %v1828
    %v1830 = vpop.f32.mrb[0].mxu0
    %v1831 = vadd.f32 0.0, %v1830
    %v1832 = vpop.f32.mrb[0].mxu0
    %v1833 = vadd.f32 0.0, %v1832
    %1834 = vmatprep.mubr.bf16.mxu0 0
    %1835 = vmatmul.mubr.bf16.gmra.mrb[0].mxu0 %v1691
    %v1836 = vpop.f32.mrb[0].mxu0
    %v1837 = vadd.f32 0.0, %v1836
    %v1838 = vpop.f32.mrb[0].mxu0
    %v1839 = vadd.f32 0.0, %v1838
    %v1840 = vpop.f32.mrb[0].mxu0
    %v1841 = vadd.f32 0.0, %v1840
    %v1842 = vpop.f32.mrb[0].mxu0
    %v1843 = vadd.f32 0.0, %v1842
    %1844 = vdwg.mxu0
    %v1845 = vpack.c.bf16 %v1813, %v1809
    %v1846 = vpack.c.bf16 %v1823, %v1819
    %v1847 = vpack.c.bf16 %v1833, %v1829
    %v1848 = vpack.c.bf16 %v1843, %v1839
    %1849 = vmatprep.subr.bf16.mxu0 0
    %1850 = vmatpush1.bf16.msra.mxu0 %v1845
    %1851 = vmatprep.subr.bf16.mxu0 0
    %1852 = vmatpush1.bf16.msra.mxu0 %v1846
    %1853 = vmatprep.subr.bf16.mxu0 0
    %1854 = vmatpush1.bf16.msra.mxu0 %v1847
    %1855 = vmatprep.subr.bf16.mxu0 0
    %1856 = vmatpush1.bf16.msra.mxu0 %v1848
    %1857 = vmatprep.subr.bf16.mxu0 0
    %1858 = vmatpush1.bf16.msra.mxu0 0
    %1859 = vmatprep.subr.bf16.mxu0 0
    %1860 = vmatpush1.bf16.msra.mxu0 0
    %1861 = vmatprep.subr.bf16.mxu0 0
    %1862 = vmatpush1.bf16.msra.mxu0 0
    %1863 = vmatprep.subr.bf16.mxu0 0
    %1864 = vmatpush1.bf16.msra.mxu0 0
    %1865 = vmatprep.subr.bf16.mxu0 0
    %1866 = vmatpush1.bf16.msra.mxu0 0
    %1867 = vmatprep.subr.bf16.mxu0 0
    %1868 = vmatpush1.bf16.msra.mxu0 0
    %1869 = vmatprep.subr.bf16.mxu0 0
    %1870 = vmatpush1.bf16.msra.mxu0 0
    %1871 = vmatprep.subr.bf16.mxu0 0
    %1872 = vmatpush1.bf16.msra.mxu0 0
    %1873 = vmatprep.subr.bf16.mxu0 0
    %1874 = vmatpush1.bf16.msra.mxu0 0
    %1875 = vmatprep.subr.bf16.mxu0 0
    %1876 = vmatpush1.bf16.msra.mxu0 0
    %1877 = vmatprep.subr.bf16.mxu0 0
    %1878 = vmatpush1.bf16.msra.mxu0 0
    %1879 = vmatprep.subr.bf16.mxu0 0
    %1880 = vmatpush1.bf16.msra.mxu0 0
    %1881 = vmatprep.mubr.bf16.mxu0 0
    %1882 = vmatmul.mubr.bf16.gmra.mrb[0].mxu0 %v319
    %v1883 = vpop.f32.mrb[0].mxu0
    %v1884 = vadd.f32 0.0, %v1883
    %v1885 = vpop.f32.mrb[0].mxu0
    %v1886 = vpop.f32.mrb[0].mxu0
    %v1887 = vadd.f32 0.0, %v1886
    %v1888 = vpop.f32.mrb[0].mxu0
    %1889 = vmatprep.mubr.bf16.mxu0 0
    %1890 = vmatmul.mubr.bf16.gmra.mrb[0].mxu0 %v322
    %v1891 = vpop.f32.mrb[0].mxu0
    %v1892 = vadd.f32 0.0, %v1891
    %v1893 = vpop.f32.mrb[0].mxu0
    %v1894 = vpop.f32.mrb[0].mxu0
    %v1895 = vadd.f32 0.0, %v1894
    %v1896 = vpop.f32.mrb[0].mxu0
    %1897 = vmatprep.mubr.bf16.mxu0 0
    %1898 = vmatmul.mubr.bf16.gmra.mrb[0].mxu0 %v325
    %v1899 = vpop.f32.mrb[0].mxu0
    %v1900 = vadd.f32 0.0, %v1899
    %v1901 = vpop.f32.mrb[0].mxu0
    %v1902 = vpop.f32.mrb[0].mxu0
    %v1903 = vadd.f32 0.0, %v1902
    %v1904 = vpop.f32.mrb[0].mxu0
    %1905 = vmatprep.mubr.bf16.mxu0 0
    %1906 = vmatmul.mubr.bf16.gmra.mrb[0].mxu0 %v328
    %v1907 = vpop.f32.mrb[0].mxu0
    %v1908 = vadd.f32 0.0, %v1907
    %v1909 = vpop.f32.mrb[0].mxu0
    %v1910 = vpop.f32.mrb[0].mxu0
    %v1911 = vadd.f32 0.0, %v1910
    %v1912 = vpop.f32.mrb[0].mxu0
    %1913 = vdwg.mxu0
    %v1914 = vadd.f32 %v1807, %v1884
    %v1915 = vadd.f32 %v1811, %v1887
    %v1916 = vadd.f32 %v1817, %v1892
    %v1917 = vadd.f32 %v1821, %v1895
    %v1918 = vadd.f32 %v1827, %v1900
    %v1919 = vadd.f32 %v1831, %v1903
    %v1920 = vadd.f32 %v1837, %v1908
    %v1921 = vadd.f32 %v1841, %v1911
    %v1923 = vlaneseq
    %v1924 = vshrl.u32 %v1923, 7
    %v1925 = vsub.s32 0, %v1924
    %v1926 = vrot.slane %v191, %v1925
    %v1928 = vadd.f32 %v1914, %v1926
    %v1929 = vadd.f32 %v1915, %v1926
    %v1930 = vadd.f32 %v1916, %v1926
    %v1931 = vadd.f32 %v1917, %v1926
    %v1932 = vadd.f32 %v1918, %v1926
    %v1933 = vadd.f32 %v1919, %v1926
    %v1934 = vadd.f32 %v1920, %v1926
    %v1935 = vadd.f32 %v1921, %v1926
    %v1936 = vpack.c.bf16 %v1681, %v1680
    %v1937 = vpack.c.bf16 %v1683, %v1682
    %v1938 = vpack.c.bf16 %v1685, %v1684
    %v1939 = vpack.c.bf16 %v1687, %v1686
    %v2004 = vunpack.c.l.b16 %v209
    %v2005 = vunpack.c.l.b16 %v210
    %v2006 = vunpack.c.l.b16 %v211
    %v2007 = vunpack.c.l.b16 %v212
    %v2008 = vunpack.c.l.b16 %v213
    %v2009 = vunpack.c.l.b16 %v214
    %v2010 = vunpack.c.l.b16 %v215
    %v2011 = vunpack.c.l.b16 %v216
    %v2012 = vunpack.c.l.b16 %v217
    %v2013 = vunpack.c.l.b16 %v218
    %v2014 = vunpack.c.l.b16 %v219
    %v2015 = vunpack.c.l.b16 %v220
    %v2016 = vunpack.c.l.b16 %v221
    %v2017 = vunpack.c.l.b16 %v222
    %v2018 = vunpack.c.l.b16 %v223
    %v2019 = vunpack.c.l.b16 %v224
    %v2020 = vunpack.c.l.b16 %v225
    %v2021 = vunpack.c.l.b16 %v226
    %v2022 = vunpack.c.l.b16 %v227
    %v2023 = vunpack.c.l.b16 %v228
    %v2024 = vunpack.c.l.b16 %v229
    %v2025 = vunpack.c.l.b16 %v230
    %v2026 = vunpack.c.l.b16 %v231
    %v2027 = vunpack.c.l.b16 %v232
    %v2028 = vunpack.c.l.b16 %v233
    %v2029 = vunpack.c.l.b16 %v234
    %v2030 = vunpack.c.l.b16 %v235
    %v2031 = vunpack.c.l.b16 %v236
    %v2032 = vunpack.c.l.b16 %v237
    %v2033 = vunpack.c.l.b16 %v238
    %v2034 = vunpack.c.l.b16 %v239
    %v2035 = vunpack.c.l.b16 %v240
    %v2036 = vunpack.c.l.b16 %v241
    %v2037 = vunpack.c.l.b16 %v242
    %v2038 = vunpack.c.l.b16 %v243
    %v2039 = vunpack.c.l.b16 %v244
    %v2040 = vunpack.c.l.b16 %v245
    %v2041 = vunpack.c.l.b16 %v246
    %v2042 = vunpack.c.l.b16 %v247
    %v2043 = vunpack.c.l.b16 %v248
    %v2044 = vunpack.c.l.b16 %v249
    %v2045 = vunpack.c.l.b16 %v250
    %v2046 = vunpack.c.l.b16 %v251
    %v2047 = vunpack.c.l.b16 %v252
    %v2048 = vunpack.c.l.b16 %v253
    %v2049 = vunpack.c.l.b16 %v254
    %v2050 = vunpack.c.l.b16 %v255
    %v2051 = vunpack.c.l.b16 %v256
    %v2052 = vunpack.c.l.b16 %v257
    %v2053 = vunpack.c.l.b16 %v258
    %v2054 = vunpack.c.l.b16 %v259
    %v2055 = vunpack.c.l.b16 %v260
    %v2056 = vunpack.c.l.b16 %v261
    %v2057 = vunpack.c.l.b16 %v262
    %v2058 = vunpack.c.l.b16 %v263
    %v2059 = vunpack.c.l.b16 %v264
    %v2060 = vunpack.c.l.b16 %v265
    %v2061 = vunpack.c.l.b16 %v266
    %v2062 = vunpack.c.l.b16 %v267
    %v2063 = vunpack.c.l.b16 %v268
    %v2064 = vunpack.c.l.b16 %v269
    %v2065 = vunpack.c.l.b16 %v270
    %v2066 = vunpack.c.l.b16 %v271
    %v2067 = vunpack.c.l.b16 %v272
    %v2068 = vpack.c.b16 %v2005, %v2004
    %v2069 = vpack.c.b16 %v2007, %v2006
    %v2070 = vpack.c.b16 %v2009, %v2008
    %v2071 = vpack.c.b16 %v2011, %v2010
    %v2072 = vpack.c.b16 %v2013, %v2012
    %v2073 = vpack.c.b16 %v2015, %v2014
    %v2074 = vpack.c.b16 %v2017, %v2016
    %v2075 = vpack.c.b16 %v2019, %v2018
    %v2076 = vpack.c.b16 %v2021, %v2020
    %v2077 = vpack.c.b16 %v2023, %v2022
    %v2078 = vpack.c.b16 %v2025, %v2024
    %v2079 = vpack.c.b16 %v2027, %v2026
    %v2080 = vpack.c.b16 %v2029, %v2028
    %v2081 = vpack.c.b16 %v2031, %v2030
    %v2082 = vpack.c.b16 %v2033, %v2032
    %v2083 = vpack.c.b16 %v2035, %v2034
    %v2084 = vpack.c.b16 %v2037, %v2036
    %v2085 = vpack.c.b16 %v2039, %v2038
    %v2086 = vpack.c.b16 %v2041, %v2040
    %v2087 = vpack.c.b16 %v2043, %v2042
    %v2088 = vpack.c.b16 %v2045, %v2044
    %v2089 = vpack.c.b16 %v2047, %v2046
    %v2090 = vpack.c.b16 %v2049, %v2048
    %v2091 = vpack.c.b16 %v2051, %v2050
    %v2092 = vpack.c.b16 %v2053, %v2052
    %v2093 = vpack.c.b16 %v2055, %v2054
    %v2094 = vpack.c.b16 %v2057, %v2056
    %v2095 = vpack.c.b16 %v2059, %v2058
    %v2096 = vpack.c.b16 %v2061, %v2060
    %v2097 = vpack.c.b16 %v2063, %v2062
    %v2098 = vpack.c.b16 %v2065, %v2064
    %v2099 = vpack.c.b16 %v2067, %v2066
    %v2101 = vsel %vm317, %v2068, 0
    %v2104 = vsel %vm317, %v2069, 0
    %v2107 = vsel %vm317, %v2070, 0
    %v2110 = vsel %vm317, %v2071, 0
    %v2113 = vsel %vm317, %v2072, 0
    %v2116 = vsel %vm317, %v2073, 0
    %v2119 = vsel %vm317, %v2074, 0
    %v2122 = vsel %vm317, %v2075, 0
    %v2125 = vsel %vm317, %v2076, 0
    %v2128 = vsel %vm317, %v2077, 0
    %v2131 = vsel %vm317, %v2078, 0
    %v2134 = vsel %vm317, %v2079, 0
    %v2137 = vsel %vm317, %v2080, 0
    %v2140 = vsel %vm317, %v2081, 0
    %v2143 = vsel %vm317, %v2082, 0
    %v2146 = vsel %vm317, %v2083, 0
    %v2149 = vsel %vm317, %v2084, 0
    %v2152 = vsel %vm317, %v2085, 0
    %v2155 = vsel %vm317, %v2086, 0
    %v2158 = vsel %vm317, %v2087, 0
    %v2161 = vsel %vm317, %v2088, 0
    %v2164 = vsel %vm317, %v2089, 0
    %v2167 = vsel %vm317, %v2090, 0
    %v2170 = vsel %vm317, %v2091, 0
    %v2173 = vsel %vm317, %v2092, 0
    %v2176 = vsel %vm317, %v2093, 0
    %v2179 = vsel %vm317, %v2094, 0
    %v2182 = vsel %vm317, %v2095, 0
    %v2185 = vsel %vm317, %v2096, 0
    %v2188 = vsel %vm317, %v2097, 0
    %v2191 = vsel %vm317, %v2098, 0
    %v2194 = vsel %vm317, %v2099, 0
    %2196 = vmatprep.subr.bf16.mxu0 0
    %2197 = vmatpush1.bf16.msra.mxu0 %v1936
    %2198 = vmatprep.subr.bf16.mxu0 0
    %2199 = vmatpush1.bf16.msra.mxu0 %v1937
    %2200 = vmatprep.subr.bf16.mxu0 0
    %2201 = vmatpush1.bf16.msra.mxu0 %v1938
    %2202 = vmatprep.subr.bf16.mxu0 0
    %2203 = vmatpush1.bf16.msra.mxu0 %v1939
    %2204 = vmatprep.subr.bf16.mxu0 0
    %2205 = vmatpush1.bf16.msra.mxu0 0
    %2206 = vmatprep.subr.bf16.mxu0 0
    %2207 = vmatpush1.bf16.msra.mxu0 0
    %2208 = vmatprep.subr.bf16.mxu0 0
    %2209 = vmatpush1.bf16.msra.mxu0 0
    %2210 = vmatprep.subr.bf16.mxu0 0
    %2211 = vmatpush1.bf16.msra.mxu0 0
    %2212 = vmatprep.subr.bf16.mxu0 0
    %2213 = vmatpush1.bf16.msra.mxu0 0
    %2214 = vmatprep.subr.bf16.mxu0 0
    %2215 = vmatpush1.bf16.msra.mxu0 0
    %2216 = vmatprep.subr.bf16.mxu0 0
    %2217 = vmatpush1.bf16.msra.mxu0 0
    %2218 = vmatprep.subr.bf16.mxu0 0
    %2219 = vmatpush1.bf16.msra.mxu0 0
    %2220 = vmatprep.subr.bf16.mxu0 0
    %2221 = vmatpush1.bf16.msra.mxu0 0
    %2222 = vmatprep.subr.bf16.mxu0 0
    %2223 = vmatpush1.bf16.msra.mxu0 0
    %2224 = vmatprep.subr.bf16.mxu0 0
    %2225 = vmatpush1.bf16.msra.mxu0 0
    %2226 = vmatprep.subr.bf16.mxu0 0
    %2227 = vmatpush1.bf16.msra.mxu0 0
    %2228 = vmatprep.mubr.bf16.mxu0 0
    %2229 = vmatmul.mubr.bf16.gmra.mrb[0].mxu0 %v2101
    %v2230 = vpop.f32.mrb[0].mxu0
    %v2231 = vadd.f32 0.0, %v2230
    %v2232 = vpop.f32.mrb[0].mxu0
    %v2233 = vpop.f32.mrb[0].mxu0
    %v2234 = vadd.f32 0.0, %v2233
    %v2235 = vpop.f32.mrb[0].mxu0
    %2236 = vmatprep.mubr.bf16.mxu0 0
    %2237 = vmatmul.mubr.bf16.gmra.mrb[0].mxu0 %v2104
    %v2238 = vpop.f32.mrb[0].mxu0
    %v2239 = vadd.f32 0.0, %v2238
    %v2240 = vpop.f32.mrb[0].mxu0
    %v2241 = vpop.f32.mrb[0].mxu0
    %v2242 = vadd.f32 0.0, %v2241
    %v2243 = vpop.f32.mrb[0].mxu0
    %2244 = vmatprep.mubr.bf16.mxu0 0
    %2245 = vmatmul.mubr.bf16.gmra.mrb[0].mxu0 %v2107
    %v2246 = vpop.f32.mrb[0].mxu0
    %v2247 = vadd.f32 0.0, %v2246
    %v2248 = vpop.f32.mrb[0].mxu0
    %v2249 = vpop.f32.mrb[0].mxu0
    %v2250 = vadd.f32 0.0, %v2249
    %v2251 = vpop.f32.mrb[0].mxu0
    %2252 = vmatprep.mubr.bf16.mxu0 0
    %2253 = vmatmul.mubr.bf16.gmra.mrb[0].mxu0 %v2110
    %v2254 = vpop.f32.mrb[0].mxu0
    %v2255 = vadd.f32 0.0, %v2254
    %v2256 = vpop.f32.mrb[0].mxu0
    %v2257 = vpop.f32.mrb[0].mxu0
    %v2258 = vadd.f32 0.0, %v2257
    %v2259 = vpop.f32.mrb[0].mxu0
    %2260 = vmatprep.mubr.bf16.mxu0 0
    %2261 = vmatmul.mubr.bf16.gmra.mrb[0].mxu0 %v2113
    %v2262 = vpop.f32.mrb[0].mxu0
    %v2263 = vadd.f32 0.0, %v2262
    %v2264 = vpop.f32.mrb[0].mxu0
    %v2265 = vpop.f32.mrb[0].mxu0
    %v2266 = vadd.f32 0.0, %v2265
    %v2267 = vpop.f32.mrb[0].mxu0
    %2268 = vmatprep.mubr.bf16.mxu0 0
    %2269 = vmatmul.mubr.bf16.gmra.mrb[0].mxu0 %v2116
    %v2270 = vpop.f32.mrb[0].mxu0
    %v2271 = vadd.f32 0.0, %v2270
    %v2272 = vpop.f32.mrb[0].mxu0
    %v2273 = vpop.f32.mrb[0].mxu0
    %v2274 = vadd.f32 0.0, %v2273
    %v2275 = vpop.f32.mrb[0].mxu0
    %2276 = vmatprep.mubr.bf16.mxu0 0
    %2277 = vmatmul.mubr.bf16.gmra.mrb[0].mxu0 %v2119
    %v2278 = vpop.f32.mrb[0].mxu0
    %v2279 = vadd.f32 0.0, %v2278
    %v2280 = vpop.f32.mrb[0].mxu0
    %v2281 = vpop.f32.mrb[0].mxu0
    %v2282 = vadd.f32 0.0, %v2281
    %v2283 = vpop.f32.mrb[0].mxu0
    %2284 = vmatprep.mubr.bf16.mxu0 0
    %2285 = vmatmul.mubr.bf16.gmra.mrb[0].mxu0 %v2122
    %v2286 = vpop.f32.mrb[0].mxu0
    %v2287 = vadd.f32 0.0, %v2286
    %v2288 = vpop.f32.mrb[0].mxu0
    %v2289 = vpop.f32.mrb[0].mxu0
    %v2290 = vadd.f32 0.0, %v2289
    %v2291 = vpop.f32.mrb[0].mxu0
    %2292 = vmatprep.mubr.bf16.mxu0 0
    %2293 = vmatmul.mubr.bf16.gmra.mrb[0].mxu0 %v2125
    %v2294 = vpop.f32.mrb[0].mxu0
    %v2295 = vadd.f32 0.0, %v2294
    %v2296 = vpop.f32.mrb[0].mxu0
    %v2297 = vpop.f32.mrb[0].mxu0
    %v2298 = vadd.f32 0.0, %v2297
    %v2299 = vpop.f32.mrb[0].mxu0
    %2300 = vmatprep.mubr.bf16.mxu0 0
    %2301 = vmatmul.mubr.bf16.gmra.mrb[0].mxu0 %v2128
    %v2302 = vpop.f32.mrb[0].mxu0
    %v2303 = vadd.f32 0.0, %v2302
    %v2304 = vpop.f32.mrb[0].mxu0
    %v2305 = vpop.f32.mrb[0].mxu0
    %v2306 = vadd.f32 0.0, %v2305
    %v2307 = vpop.f32.mrb[0].mxu0
    %2308 = vmatprep.mubr.bf16.mxu0 0
    %2309 = vmatmul.mubr.bf16.gmra.mrb[0].mxu0 %v2131
    %v2310 = vpop.f32.mrb[0].mxu0
    %v2311 = vadd.f32 0.0, %v2310
    %v2312 = vpop.f32.mrb[0].mxu0
    %v2313 = vpop.f32.mrb[0].mxu0
    %v2314 = vadd.f32 0.0, %v2313
    %v2315 = vpop.f32.mrb[0].mxu0
    %2316 = vmatprep.mubr.bf16.mxu0 0
    %2317 = vmatmul.mubr.bf16.gmra.mrb[0].mxu0 %v2134
    %v2318 = vpop.f32.mrb[0].mxu0
    %v2319 = vadd.f32 0.0, %v2318
    %v2320 = vpop.f32.mrb[0].mxu0
    %v2321 = vpop.f32.mrb[0].mxu0
    %v2322 = vadd.f32 0.0, %v2321
    %v2323 = vpop.f32.mrb[0].mxu0
    %2324 = vmatprep.mubr.bf16.mxu0 0
    %2325 = vmatmul.mubr.bf16.gmra.mrb[0].mxu0 %v2137
    %v2326 = vpop.f32.mrb[0].mxu0
    %v2327 = vadd.f32 0.0, %v2326
    %v2328 = vpop.f32.mrb[0].mxu0
    %v2329 = vpop.f32.mrb[0].mxu0
    %v2330 = vadd.f32 0.0, %v2329
    %v2331 = vpop.f32.mrb[0].mxu0
    %2332 = vmatprep.mubr.bf16.mxu0 0
    %2333 = vmatmul.mubr.bf16.gmra.mrb[0].mxu0 %v2140
    %v2334 = vpop.f32.mrb[0].mxu0
    %v2335 = vadd.f32 0.0, %v2334
    %v2336 = vpop.f32.mrb[0].mxu0
    %v2337 = vpop.f32.mrb[0].mxu0
    %v2338 = vadd.f32 0.0, %v2337
    %v2339 = vpop.f32.mrb[0].mxu0
    %2340 = vmatprep.mubr.bf16.mxu0 0
    %2341 = vmatmul.mubr.bf16.gmra.mrb[0].mxu0 %v2143
    %v2342 = vpop.f32.mrb[0].mxu0
    %v2343 = vadd.f32 0.0, %v2342
    %v2344 = vpop.f32.mrb[0].mxu0
    %v2345 = vpop.f32.mrb[0].mxu0
    %v2346 = vadd.f32 0.0, %v2345
    %v2347 = vpop.f32.mrb[0].mxu0
    %2348 = vmatprep.mubr.bf16.mxu0 0
    %2349 = vmatmul.mubr.bf16.gmra.mrb[0].mxu0 %v2146
    %v2350 = vpop.f32.mrb[0].mxu0
    %v2351 = vadd.f32 0.0, %v2350
    %v2352 = vpop.f32.mrb[0].mxu0
    %v2353 = vpop.f32.mrb[0].mxu0
    %v2354 = vadd.f32 0.0, %v2353
    %v2355 = vpop.f32.mrb[0].mxu0
    %2356 = vmatprep.mubr.bf16.mxu0 0
    %2357 = vmatmul.mubr.bf16.gmra.mrb[0].mxu0 %v2149
    %v2358 = vpop.f32.mrb[0].mxu0
    %v2359 = vadd.f32 0.0, %v2358
    %v2360 = vpop.f32.mrb[0].mxu0
    %v2361 = vpop.f32.mrb[0].mxu0
    %v2362 = vadd.f32 0.0, %v2361
    %v2363 = vpop.f32.mrb[0].mxu0
    %2364 = vmatprep.mubr.bf16.mxu0 0
    %2365 = vmatmul.mubr.bf16.gmra.mrb[0].mxu0 %v2152
    %v2366 = vpop.f32.mrb[0].mxu0
    %v2367 = vadd.f32 0.0, %v2366
    %v2368 = vpop.f32.mrb[0].mxu0
    %v2369 = vpop.f32.mrb[0].mxu0
    %v2370 = vadd.f32 0.0, %v2369
    %v2371 = vpop.f32.mrb[0].mxu0
    %2372 = vmatprep.mubr.bf16.mxu0 0
    %2373 = vmatmul.mubr.bf16.gmra.mrb[0].mxu0 %v2155
    %v2374 = vpop.f32.mrb[0].mxu0
    %v2375 = vadd.f32 0.0, %v2374
    %v2376 = vpop.f32.mrb[0].mxu0
    %v2377 = vpop.f32.mrb[0].mxu0
    %v2378 = vadd.f32 0.0, %v2377
    %v2379 = vpop.f32.mrb[0].mxu0
    %2380 = vmatprep.mubr.bf16.mxu0 0
    %2381 = vmatmul.mubr.bf16.gmra.mrb[0].mxu0 %v2158
    %v2382 = vpop.f32.mrb[0].mxu0
    %v2383 = vadd.f32 0.0, %v2382
    %v2384 = vpop.f32.mrb[0].mxu0
    %v2385 = vpop.f32.mrb[0].mxu0
    %v2386 = vadd.f32 0.0, %v2385
    %v2387 = vpop.f32.mrb[0].mxu0
    %2388 = vmatprep.mubr.bf16.mxu0 0
    %2389 = vmatmul.mubr.bf16.gmra.mrb[0].mxu0 %v2161
    %v2390 = vpop.f32.mrb[0].mxu0
    %v2391 = vadd.f32 0.0, %v2390
    %v2392 = vpop.f32.mrb[0].mxu0
    %v2393 = vpop.f32.mrb[0].mxu0
    %v2394 = vadd.f32 0.0, %v2393
    %v2395 = vpop.f32.mrb[0].mxu0
    %2396 = vmatprep.mubr.bf16.mxu0 0
    %2397 = vmatmul.mubr.bf16.gmra.mrb[0].mxu0 %v2164
    %v2398 = vpop.f32.mrb[0].mxu0
    %v2399 = vadd.f32 0.0, %v2398
    %v2400 = vpop.f32.mrb[0].mxu0
    %v2401 = vpop.f32.mrb[0].mxu0
    %v2402 = vadd.f32 0.0, %v2401
    %v2403 = vpop.f32.mrb[0].mxu0
    %2404 = vmatprep.mubr.bf16.mxu0 0
    %2405 = vmatmul.mubr.bf16.gmra.mrb[0].mxu0 %v2167
    %v2406 = vpop.f32.mrb[0].mxu0
    %v2407 = vadd.f32 0.0, %v2406
    %v2408 = vpop.f32.mrb[0].mxu0
    %v2409 = vpop.f32.mrb[0].mxu0
    %v2410 = vadd.f32 0.0, %v2409
    %v2411 = vpop.f32.mrb[0].mxu0
    %2412 = vmatprep.mubr.bf16.mxu0 0
    %2413 = vmatmul.mubr.bf16.gmra.mrb[0].mxu0 %v2170
    %v2414 = vpop.f32.mrb[0].mxu0
    %v2415 = vadd.f32 0.0, %v2414
    %v2416 = vpop.f32.mrb[0].mxu0
    %v2417 = vpop.f32.mrb[0].mxu0
    %v2418 = vadd.f32 0.0, %v2417
    %v2419 = vpop.f32.mrb[0].mxu0
    %2420 = vmatprep.mubr.bf16.mxu0 0
    %2421 = vmatmul.mubr.bf16.gmra.mrb[0].mxu0 %v2173
    %v2422 = vpop.f32.mrb[0].mxu0
    %v2423 = vadd.f32 0.0, %v2422
    %v2424 = vpop.f32.mrb[0].mxu0
    %v2425 = vpop.f32.mrb[0].mxu0
    %v2426 = vadd.f32 0.0, %v2425
    %v2427 = vpop.f32.mrb[0].mxu0
    %2428 = vmatprep.mubr.bf16.mxu0 0
    %2429 = vmatmul.mubr.bf16.gmra.mrb[0].mxu0 %v2176
    %v2430 = vpop.f32.mrb[0].mxu0
    %v2431 = vadd.f32 0.0, %v2430
    %v2432 = vpop.f32.mrb[0].mxu0
    %v2433 = vpop.f32.mrb[0].mxu0
    %v2434 = vadd.f32 0.0, %v2433
    %v2435 = vpop.f32.mrb[0].mxu0
    %2436 = vmatprep.mubr.bf16.mxu0 0
    %2437 = vmatmul.mubr.bf16.gmra.mrb[0].mxu0 %v2179
    %v2438 = vpop.f32.mrb[0].mxu0
    %v2439 = vadd.f32 0.0, %v2438
    %v2440 = vpop.f32.mrb[0].mxu0
    %v2441 = vpop.f32.mrb[0].mxu0
    %v2442 = vadd.f32 0.0, %v2441
    %v2443 = vpop.f32.mrb[0].mxu0
    %2444 = vmatprep.mubr.bf16.mxu0 0
    %2445 = vmatmul.mubr.bf16.gmra.mrb[0].mxu0 %v2182
    %v2446 = vpop.f32.mrb[0].mxu0
    %v2447 = vadd.f32 0.0, %v2446
    %v2448 = vpop.f32.mrb[0].mxu0
    %v2449 = vpop.f32.mrb[0].mxu0
    %v2450 = vadd.f32 0.0, %v2449
    %v2451 = vpop.f32.mrb[0].mxu0
    %2452 = vmatprep.mubr.bf16.mxu0 0
    %2453 = vmatmul.mubr.bf16.gmra.mrb[0].mxu0 %v2185
    %v2454 = vpop.f32.mrb[0].mxu0
    %v2455 = vadd.f32 0.0, %v2454
    %v2456 = vpop.f32.mrb[0].mxu0
    %v2457 = vpop.f32.mrb[0].mxu0
    %v2458 = vadd.f32 0.0, %v2457
    %v2459 = vpop.f32.mrb[0].mxu0
    %2460 = vmatprep.mubr.bf16.mxu0 0
    %2461 = vmatmul.mubr.bf16.gmra.mrb[0].mxu0 %v2188
    %v2462 = vpop.f32.mrb[0].mxu0
    %v2463 = vadd.f32 0.0, %v2462
    %v2464 = vpop.f32.mrb[0].mxu0
    %v2465 = vpop.f32.mrb[0].mxu0
    %v2466 = vadd.f32 0.0, %v2465
    %v2467 = vpop.f32.mrb[0].mxu0
    %2468 = vmatprep.mubr.bf16.mxu0 0
    %2469 = vmatmul.mubr.bf16.gmra.mrb[0].mxu0 %v2191
    %v2470 = vpop.f32.mrb[0].mxu0
    %v2471 = vadd.f32 0.0, %v2470
    %v2472 = vpop.f32.mrb[0].mxu0
    %v2473 = vpop.f32.mrb[0].mxu0
    %v2474 = vadd.f32 0.0, %v2473
    %v2475 = vpop.f32.mrb[0].mxu0
    %2476 = vmatprep.mubr.bf16.mxu0 0
    %2477 = vmatmul.mubr.bf16.gmra.mrb[0].mxu0 %v2194
    %v2478 = vpop.f32.mrb[0].mxu0
    %v2479 = vadd.f32 0.0, %v2478
    %v2480 = vpop.f32.mrb[0].mxu0
    %v2481 = vpop.f32.mrb[0].mxu0
    %v2482 = vadd.f32 0.0, %v2481
    %v2483 = vpop.f32.mrb[0].mxu0
    %2484 = vdwg.mxu0
    %v2485 = vmul.f32 %v2231, %v2295
    %v2486 = vmul.f32 %v2234, %v2298
    %v2487 = vmul.f32 %v2239, %v2303
    %v2488 = vmul.f32 %v2242, %v2306
    %v2489 = vmul.f32 %v2247, %v2311
    %v2490 = vmul.f32 %v2250, %v2314
    %v2491 = vmul.f32 %v2255, %v2319
    %v2492 = vmul.f32 %v2258, %v2322
    %v2493 = vmul.f32 %v2263, %v2327
    %v2494 = vmul.f32 %v2266, %v2330
    %v2495 = vmul.f32 %v2271, %v2335
    %v2496 = vmul.f32 %v2274, %v2338
    %v2497 = vmul.f32 %v2279, %v2343
    %v2498 = vmul.f32 %v2282, %v2346
    %v2499 = vmul.f32 %v2287, %v2351
    %v2500 = vmul.f32 %v2290, %v2354
    %2501 = vadd.xlane.f32.xlu0 %v2485
    %v2502 = vpop.xlane.xlu0 %2501
    %2503 = vadd.xlane.f32.xlu0 %v2486
    %v2504 = vpop.xlane.xlu0 %2503
    %2505 = vadd.xlane.f32.xlu0 %v2487
    %v2506 = vpop.xlane.xlu0 %2505
    %2507 = vadd.xlane.f32.xlu0 %v2488
    %v2508 = vpop.xlane.xlu0 %2507
    %2509 = vadd.xlane.f32.xlu0 %v2489
    %v2510 = vpop.xlane.xlu0 %2509
    %2511 = vadd.xlane.f32.xlu0 %v2490
    %v2512 = vpop.xlane.xlu0 %2511
    %2513 = vadd.xlane.f32.xlu0 %v2491
    %v2514 = vpop.xlane.xlu0 %2513
    %2515 = vadd.xlane.f32.xlu0 %v2492
    %v2516 = vpop.xlane.xlu0 %2515
    %2517 = vadd.xlane.f32.xlu0 %v2493
    %v2518 = vpop.xlane.xlu0 %2517
    %2519 = vadd.xlane.f32.xlu0 %v2494
    %v2520 = vpop.xlane.xlu0 %2519
    %2521 = vadd.xlane.f32.xlu0 %v2495
    %v2522 = vpop.xlane.xlu0 %2521
    %2523 = vadd.xlane.f32.xlu0 %v2496
    %v2524 = vpop.xlane.xlu0 %2523
    %2525 = vadd.xlane.f32.xlu0 %v2497
    %v2526 = vpop.xlane.xlu0 %2525
    %2527 = vadd.xlane.f32.xlu0 %v2498
    %v2528 = vpop.xlane.xlu0 %2527
    %2529 = vadd.xlane.f32.xlu0 %v2499
    %v2530 = vpop.xlane.xlu0 %2529
    %2531 = vadd.xlane.f32.xlu0 %v2500
    %v2532 = vpop.xlane.xlu0 %2531
    %v2533 = vmul.f32 %v2359, %v2423
    %v2534 = vmul.f32 %v2362, %v2426
    %v2535 = vmul.f32 %v2367, %v2431
    %v2536 = vmul.f32 %v2370, %v2434
    %v2537 = vmul.f32 %v2375, %v2439
    %v2538 = vmul.f32 %v2378, %v2442
    %v2539 = vmul.f32 %v2383, %v2447
    %v2540 = vmul.f32 %v2386, %v2450
    %v2541 = vmul.f32 %v2391, %v2455
    %v2542 = vmul.f32 %v2394, %v2458
    %v2543 = vmul.f32 %v2399, %v2463
    %v2544 = vmul.f32 %v2402, %v2466
    %v2545 = vmul.f32 %v2407, %v2471
    %v2546 = vmul.f32 %v2410, %v2474
    %v2547 = vmul.f32 %v2415, %v2479
    %v2548 = vmul.f32 %v2418, %v2482
    %2549 = vadd.xlane.f32.xlu0 %v2533
    %v2550 = vpop.xlane.xlu0 %2549
    %2551 = vadd.xlane.f32.xlu0 %v2534
    %v2552 = vpop.xlane.xlu0 %2551
    %2553 = vadd.xlane.f32.xlu0 %v2535
    %v2554 = vpop.xlane.xlu0 %2553
    %2555 = vadd.xlane.f32.xlu0 %v2536
    %v2556 = vpop.xlane.xlu0 %2555
    %2557 = vadd.xlane.f32.xlu0 %v2537
    %v2558 = vpop.xlane.xlu0 %2557
    %2559 = vadd.xlane.f32.xlu0 %v2538
    %v2560 = vpop.xlane.xlu0 %2559
    %2561 = vadd.xlane.f32.xlu0 %v2539
    %v2562 = vpop.xlane.xlu0 %2561
    %2563 = vadd.xlane.f32.xlu0 %v2540
    %v2564 = vpop.xlane.xlu0 %2563
    %2565 = vadd.xlane.f32.xlu0 %v2541
    %v2566 = vpop.xlane.xlu0 %2565
    %2567 = vadd.xlane.f32.xlu0 %v2542
    %v2568 = vpop.xlane.xlu0 %2567
    %2569 = vadd.xlane.f32.xlu0 %v2543
    %v2570 = vpop.xlane.xlu0 %2569
    %2571 = vadd.xlane.f32.xlu0 %v2544
    %v2572 = vpop.xlane.xlu0 %2571
    %2573 = vadd.xlane.f32.xlu0 %v2545
    %v2574 = vpop.xlane.xlu0 %2573
    %2575 = vadd.xlane.f32.xlu0 %v2546
    %v2576 = vpop.xlane.xlu0 %2575
    %2577 = vadd.xlane.f32.xlu0 %v2547
    %v2578 = vpop.xlane.xlu0 %2577
    %2579 = vadd.xlane.f32.xlu0 %v2548
    %v2580 = vpop.xlane.xlu0 %2579
    %v2581 = vlaneseq
    %v2582 = vshrl.u32 %v2581, 7
    %v2583 = vadd.s32 %v2582, 8
    %v2584 = vadd.s32 %v2582, 16
    %v2585 = vadd.s32 %v2582, 24
    %v2586 = vadd.s32 %v2582, 32
    %v2587 = vadd.s32 %v2582, 40
    %v2588 = vadd.s32 %v2582, 48
    %v2589 = vadd.s32 %v2582, 56
    %v2590 = vadd.s32 %v2582, 64
    %v2591 = vadd.s32 %v2582, 72
    %v2592 = vadd.s32 %v2582, 80
    %v2593 = vadd.s32 %v2582, 88
    %v2594 = vadd.s32 %v2582, 96
    %v2595 = vadd.s32 %v2582, 104
    %v2596 = vadd.s32 %v2582, 112
    %v2597 = vadd.s32 %v2582, 120
    %vm2598 = vcmp.lt.s32.totalorder %v2582, 128
    %vm2599 = vcmp.lt.s32.totalorder %v2583, 128
    %vm2600 = vcmp.lt.s32.totalorder %v2584, 128
    %vm2601 = vcmp.lt.s32.totalorder %v2585, 128
    %vm2602 = vcmp.lt.s32.totalorder %v2586, 128
    %vm2603 = vcmp.lt.s32.totalorder %v2587, 128
    %vm2604 = vcmp.lt.s32.totalorder %v2588, 128
    %vm2605 = vcmp.lt.s32.totalorder %v2589, 128
    %vm2606 = vcmp.lt.s32.totalorder %v2590, 128
    %vm2607 = vcmp.lt.s32.totalorder %v2591, 128
    %vm2608 = vcmp.lt.s32.totalorder %v2592, 128
    %vm2609 = vcmp.lt.s32.totalorder %v2593, 128
    %vm2610 = vcmp.lt.s32.totalorder %v2594, 128
    %vm2611 = vcmp.lt.s32.totalorder %v2595, 128
    %vm2612 = vcmp.lt.s32.totalorder %v2596, 128
    %vm2613 = vcmp.lt.s32.totalorder %v2597, 128
    %v2614 = vmin.f32 %v2502, 0.0
    %v2615 = vmin.f32 %v2504, 0.0
    %v2616 = vmin.f32 %v2506, 0.0
    %v2617 = vmin.f32 %v2508, 0.0
    %v2618 = vmin.f32 %v2510, 0.0
    %v2619 = vmin.f32 %v2512, 0.0
    %v2620 = vmin.f32 %v2514, 0.0
    %v2621 = vmin.f32 %v2516, 0.0
    %v2622 = vmin.f32 %v2518, 0.0
    %v2623 = vmin.f32 %v2520, 0.0
    %v2624 = vmin.f32 %v2522, 0.0
    %v2625 = vmin.f32 %v2524, 0.0
    %v2626 = vmin.f32 %v2526, 0.0
    %v2627 = vmin.f32 %v2528, 0.0
    %v2628 = vmin.f32 %v2530, 0.0
    %v2629 = vmin.f32 %v2532, 0.0
    %v2630 = vand.u32 2147483647, %v2502
    %v2631 = vand.u32 2147483647, %v2504
    %v2632 = vand.u32 2147483647, %v2506
    %v2633 = vand.u32 2147483647, %v2508
    %v2634 = vand.u32 2147483647, %v2510
    %v2635 = vand.u32 2147483647, %v2512
    %v2636 = vand.u32 2147483647, %v2514
    %v2637 = vand.u32 2147483647, %v2516
    %v2638 = vand.u32 2147483647, %v2518
    %v2639 = vand.u32 2147483647, %v2520
    %v2640 = vand.u32 2147483647, %v2522
    %v2641 = vand.u32 2147483647, %v2524
    %v2642 = vand.u32 2147483647, %v2526
    %v2643 = vand.u32 2147483647, %v2528
    %v2644 = vand.u32 2147483647, %v2530
    %v2645 = vand.u32 2147483647, %v2532
    %v2646 = vsub.f32 0.0, %v2630
    %v2647 = vsub.f32 0.0, %v2631
    %v2648 = vsub.f32 0.0, %v2632
    %v2649 = vsub.f32 0.0, %v2633
    %v2650 = vsub.f32 0.0, %v2634
    %v2651 = vsub.f32 0.0, %v2635
    %v2652 = vsub.f32 0.0, %v2636
    %v2653 = vsub.f32 0.0, %v2637
    %v2654 = vsub.f32 0.0, %v2638
    %v2655 = vsub.f32 0.0, %v2639
    %v2656 = vsub.f32 0.0, %v2640
    %v2657 = vsub.f32 0.0, %v2641
    %v2658 = vsub.f32 0.0, %v2642
    %v2659 = vsub.f32 0.0, %v2643
    %v2660 = vsub.f32 0.0, %v2644
    %v2661 = vsub.f32 0.0, %v2645
    %v2662 = vmul.f32 %v2646, 1.442695
    %v2663 = vpow.pop %v2662
    %v2664 = vmul.f32 %v2647, 1.442695
    %v2665 = vpow.pop %v2664
    %v2666 = vmul.f32 %v2648, 1.442695
    %v2667 = vpow.pop %v2666
    %v2668 = vmul.f32 %v2649, 1.442695
    %v2669 = vpow.pop %v2668
    %v2670 = vmul.f32 %v2650, 1.442695
    %v2671 = vpow.pop %v2670
    %v2672 = vmul.f32 %v2651, 1.442695
    %v2673 = vpow.pop %v2672
    %v2674 = vmul.f32 %v2652, 1.442695
    %v2675 = vpow.pop %v2674
    %v2676 = vmul.f32 %v2653, 1.442695
    %v2677 = vpow.pop %v2676
    %v2678 = vmul.f32 %v2654, 1.442695
    %v2679 = vpow.pop %v2678
    %v2680 = vmul.f32 %v2655, 1.442695
    %v2681 = vpow.pop %v2680
    %v2682 = vmul.f32 %v2656, 1.442695
    %v2683 = vpow.pop %v2682
    %v2684 = vmul.f32 %v2657, 1.442695
    %v2685 = vpow.pop %v2684
    %v2686 = vmul.f32 %v2658, 1.442695
    %v2687 = vpow.pop %v2686
    %v2688 = vmul.f32 %v2659, 1.442695
    %v2689 = vpow.pop %v2688
    %v2690 = vmul.f32 %v2660, 1.442695
    %v2691 = vpow.pop %v2690
    %v2692 = vmul.f32 %v2661, 1.442695
    %v2693 = vpow.pop %v2692
    %v2694 = vadd.f32 %v2663, 1.0
    %v2695 = vadd.f32 %v2665, 1.0
    %v2696 = vadd.f32 %v2667, 1.0
    %v2697 = vadd.f32 %v2669, 1.0
    %v2698 = vadd.f32 %v2671, 1.0
    %v2699 = vadd.f32 %v2673, 1.0
    %v2700 = vadd.f32 %v2675, 1.0
    %v2701 = vadd.f32 %v2677, 1.0
    %v2702 = vadd.f32 %v2679, 1.0
    %v2703 = vadd.f32 %v2681, 1.0
    %v2704 = vadd.f32 %v2683, 1.0
    %v2705 = vadd.f32 %v2685, 1.0
    %v2706 = vadd.f32 %v2687, 1.0
    %v2707 = vadd.f32 %v2689, 1.0
    %v2708 = vadd.f32 %v2691, 1.0
    %v2709 = vadd.f32 %v2693, 1.0
    %v2710 = vlog2.pop %v2694
    %v2711 = vmul.f32 %v2710, 0.6931472
    %v2712 = vlog2.pop %v2695
    %v2713 = vmul.f32 %v2712, 0.6931472
    %v2714 = vlog2.pop %v2696
    %v2715 = vmul.f32 %v2714, 0.6931472
    %v2716 = vlog2.pop %v2697
    %v2717 = vmul.f32 %v2716, 0.6931472
    %v2718 = vlog2.pop %v2698
    %v2719 = vmul.f32 %v2718, 0.6931472
    %v2720 = vlog2.pop %v2699
    %v2721 = vmul.f32 %v2720, 0.6931472
    %v2722 = vlog2.pop %v2700
    %v2723 = vmul.f32 %v2722, 0.6931472
    %v2724 = vlog2.pop %v2701
    %v2725 = vmul.f32 %v2724, 0.6931472
    %v2726 = vlog2.pop %v2702
    %v2727 = vmul.f32 %v2726, 0.6931472
    %v2728 = vlog2.pop %v2703
    %v2729 = vmul.f32 %v2728, 0.6931472
    %v2730 = vlog2.pop %v2704
    %v2731 = vmul.f32 %v2730, 0.6931472
    %v2732 = vlog2.pop %v2705
    %v2733 = vmul.f32 %v2732, 0.6931472
    %v2734 = vlog2.pop %v2706
    %v2735 = vmul.f32 %v2734, 0.6931472
    %v2736 = vlog2.pop %v2707
    %v2737 = vmul.f32 %v2736, 0.6931472
    %v2738 = vlog2.pop %v2708
    %v2739 = vmul.f32 %v2738, 0.6931472
    %v2740 = vlog2.pop %v2709
    %v2741 = vmul.f32 %v2740, 0.6931472
    %v2742 = vsub.f32 %v2614, %v2711
    %v2743 = vsub.f32 %v2615, %v2713
    %v2744 = vsub.f32 %v2616, %v2715
    %v2745 = vsub.f32 %v2617, %v2717
    %v2746 = vsub.f32 %v2618, %v2719
    %v2747 = vsub.f32 %v2619, %v2721
    %v2748 = vsub.f32 %v2620, %v2723
    %v2749 = vsub.f32 %v2621, %v2725
    %v2750 = vsub.f32 %v2622, %v2727
    %v2751 = vsub.f32 %v2623, %v2729
    %v2752 = vsub.f32 %v2624, %v2731
    %v2753 = vsub.f32 %v2625, %v2733
    %v2754 = vsub.f32 %v2626, %v2735
    %v2755 = vsub.f32 %v2627, %v2737
    %v2756 = vsub.f32 %v2628, %v2739
    %v2757 = vsub.f32 %v2629, %v2741
    %v2758 = vsel %vm2598, %v2742, 0.0
    %v2759 = vsel %vm2599, %v2743, 0.0
    %v2760 = vsel %vm2600, %v2744, 0.0
    %v2761 = vsel %vm2601, %v2745, 0.0
    %v2762 = vsel %vm2602, %v2746, 0.0
    %v2763 = vsel %vm2603, %v2747, 0.0
    %v2764 = vsel %vm2604, %v2748, 0.0
    %v2765 = vsel %vm2605, %v2749, 0.0
    %v2766 = vsel %vm2606, %v2750, 0.0
    %v2767 = vsel %vm2607, %v2751, 0.0
    %v2768 = vsel %vm2608, %v2752, 0.0
    %v2769 = vsel %vm2609, %v2753, 0.0
    %v2770 = vsel %vm2610, %v2754, 0.0
    %v2771 = vsel %vm2611, %v2755, 0.0
    %v2772 = vsel %vm2612, %v2756, 0.0
    %v2773 = vsel %vm2613, %v2757, 0.0
    %v2774 = vsub.f32 0.0, %v2550
    %v2775 = vsub.f32 0.0, %v2552
    %v2776 = vsub.f32 0.0, %v2554
    %v2777 = vsub.f32 0.0, %v2556
    %v2778 = vsub.f32 0.0, %v2558
    %v2779 = vsub.f32 0.0, %v2560
    %v2780 = vsub.f32 0.0, %v2562
    %v2781 = vsub.f32 0.0, %v2564
    %v2782 = vsub.f32 0.0, %v2566
    %v2783 = vsub.f32 0.0, %v2568
    %v2784 = vsub.f32 0.0, %v2570
    %v2785 = vsub.f32 0.0, %v2572
    %v2786 = vsub.f32 0.0, %v2574
    %v2787 = vsub.f32 0.0, %v2576
    %v2788 = vsub.f32 0.0, %v2578
    %v2789 = vsub.f32 0.0, %v2580
    %v2790 = vmin.f32 %v2774, 0.0
    %v2791 = vmin.f32 %v2775, 0.0
    %v2792 = vmin.f32 %v2776, 0.0
    %v2793 = vmin.f32 %v2777, 0.0
    %v2794 = vmin.f32 %v2778, 0.0
    %v2795 = vmin.f32 %v2779, 0.0
    %v2796 = vmin.f32 %v2780, 0.0
    %v2797 = vmin.f32 %v2781, 0.0
    %v2798 = vmin.f32 %v2782, 0.0
    %v2799 = vmin.f32 %v2783, 0.0
    %v2800 = vmin.f32 %v2784, 0.0
    %v2801 = vmin.f32 %v2785, 0.0
    %v2802 = vmin.f32 %v2786, 0.0
    %v2803 = vmin.f32 %v2787, 0.0
    %v2804 = vmin.f32 %v2788, 0.0
    %v2805 = vmin.f32 %v2789, 0.0
    %v2806 = vand.u32 2147483647, %v2774
    %v2807 = vand.u32 2147483647, %v2775
    %v2808 = vand.u32 2147483647, %v2776
    %v2809 = vand.u32 2147483647, %v2777
    %v2810 = vand.u32 2147483647, %v2778
    %v2811 = vand.u32 2147483647, %v2779
    %v2812 = vand.u32 2147483647, %v2780
    %v2813 = vand.u32 2147483647, %v2781
    %v2814 = vand.u32 2147483647, %v2782
    %v2815 = vand.u32 2147483647, %v2783
    %v2816 = vand.u32 2147483647, %v2784
    %v2817 = vand.u32 2147483647, %v2785
    %v2818 = vand.u32 2147483647, %v2786
    %v2819 = vand.u32 2147483647, %v2787
    %v2820 = vand.u32 2147483647, %v2788
    %v2821 = vand.u32 2147483647, %v2789
    %v2822 = vsub.f32 0.0, %v2806
    %v2823 = vsub.f32 0.0, %v2807
    %v2824 = vsub.f32 0.0, %v2808
    %v2825 = vsub.f32 0.0, %v2809
    %v2826 = vsub.f32 0.0, %v2810
    %v2827 = vsub.f32 0.0, %v2811
    %v2828 = vsub.f32 0.0, %v2812
    %v2829 = vsub.f32 0.0, %v2813
    %v2830 = vsub.f32 0.0, %v2814
    %v2831 = vsub.f32 0.0, %v2815
    %v2832 = vsub.f32 0.0, %v2816
    %v2833 = vsub.f32 0.0, %v2817
    %v2834 = vsub.f32 0.0, %v2818
    %v2835 = vsub.f32 0.0, %v2819
    %v2836 = vsub.f32 0.0, %v2820
    %v2837 = vsub.f32 0.0, %v2821
    %v2838 = vmul.f32 %v2822, 1.442695
    %v2839 = vpow.pop %v2838
    %v2840 = vmul.f32 %v2823, 1.442695
    %v2841 = vpow.pop %v2840
    %v2842 = vmul.f32 %v2824, 1.442695
    %v2843 = vpow.pop %v2842
    %v2844 = vmul.f32 %v2825, 1.442695
    %v2845 = vpow.pop %v2844
    %v2846 = vmul.f32 %v2826, 1.442695
    %v2847 = vpow.pop %v2846
    %v2848 = vmul.f32 %v2827, 1.442695
    %v2849 = vpow.pop %v2848
    %v2850 = vmul.f32 %v2828, 1.442695
    %v2851 = vpow.pop %v2850
    %v2852 = vmul.f32 %v2829, 1.442695
    %v2853 = vpow.pop %v2852
    %v2854 = vmul.f32 %v2830, 1.442695
    %v2855 = vpow.pop %v2854
    %v2856 = vmul.f32 %v2831, 1.442695
    %v2857 = vpow.pop %v2856
    %v2858 = vmul.f32 %v2832, 1.442695
    %v2859 = vpow.pop %v2858
    %v2860 = vmul.f32 %v2833, 1.442695
    %v2861 = vpow.pop %v2860
    %v2862 = vmul.f32 %v2834, 1.442695
    %v2863 = vpow.pop %v2862
    %v2864 = vmul.f32 %v2835, 1.442695
    %v2865 = vpow.pop %v2864
    %v2866 = vmul.f32 %v2836, 1.442695
    %v2867 = vpow.pop %v2866
    %v2868 = vmul.f32 %v2837, 1.442695
    %v2869 = vpow.pop %v2868
    %v2870 = vadd.f32 %v2839, 1.0
    %v2871 = vadd.f32 %v2841, 1.0
    %v2872 = vadd.f32 %v2843, 1.0
    %v2873 = vadd.f32 %v2845, 1.0
    %v2874 = vadd.f32 %v2847, 1.0
    %v2875 = vadd.f32 %v2849, 1.0
    %v2876 = vadd.f32 %v2851, 1.0
    %v2877 = vadd.f32 %v2853, 1.0
    %v2878 = vadd.f32 %v2855, 1.0
    %v2879 = vadd.f32 %v2857, 1.0
    %v2880 = vadd.f32 %v2859, 1.0
    %v2881 = vadd.f32 %v2861, 1.0
    %v2882 = vadd.f32 %v2863, 1.0
    %v2883 = vadd.f32 %v2865, 1.0
    %v2884 = vadd.f32 %v2867, 1.0
    %v2885 = vadd.f32 %v2869, 1.0
    %v2886 = vlog2.pop %v2870
    %v2887 = vmul.f32 %v2886, 0.6931472
    %v2888 = vlog2.pop %v2871
    %v2889 = vmul.f32 %v2888, 0.6931472
    %v2890 = vlog2.pop %v2872
    %v2891 = vmul.f32 %v2890, 0.6931472
    %v2892 = vlog2.pop %v2873
    %v2893 = vmul.f32 %v2892, 0.6931472
    %v2894 = vlog2.pop %v2874
    %v2895 = vmul.f32 %v2894, 0.6931472
    %v2896 = vlog2.pop %v2875
    %v2897 = vmul.f32 %v2896, 0.6931472
    %v2898 = vlog2.pop %v2876
    %v2899 = vmul.f32 %v2898, 0.6931472
    %v2900 = vlog2.pop %v2877
    %v2901 = vmul.f32 %v2900, 0.6931472
    %v2902 = vlog2.pop %v2878
    %v2903 = vmul.f32 %v2902, 0.6931472
    %v2904 = vlog2.pop %v2879
    %v2905 = vmul.f32 %v2904, 0.6931472
    %v2906 = vlog2.pop %v2880
    %v2907 = vmul.f32 %v2906, 0.6931472
    %v2908 = vlog2.pop %v2881
    %v2909 = vmul.f32 %v2908, 0.6931472
    %v2910 = vlog2.pop %v2882
    %v2911 = vmul.f32 %v2910, 0.6931472
    %v2912 = vlog2.pop %v2883
    %v2913 = vmul.f32 %v2912, 0.6931472
    %v2914 = vlog2.pop %v2884
    %v2915 = vmul.f32 %v2914, 0.6931472
    %v2916 = vlog2.pop %v2885
    %v2917 = vmul.f32 %v2916, 0.6931472
    %v2918 = vsub.f32 %v2790, %v2887
    %v2919 = vsub.f32 %v2791, %v2889
    %v2920 = vsub.f32 %v2792, %v2891
    %v2921 = vsub.f32 %v2793, %v2893
    %v2922 = vsub.f32 %v2794, %v2895
    %v2923 = vsub.f32 %v2795, %v2897
    %v2924 = vsub.f32 %v2796, %v2899
    %v2925 = vsub.f32 %v2797, %v2901
    %v2926 = vsub.f32 %v2798, %v2903
    %v2927 = vsub.f32 %v2799, %v2905
    %v2928 = vsub.f32 %v2800, %v2907
    %v2929 = vsub.f32 %v2801, %v2909
    %v2930 = vsub.f32 %v2802, %v2911
    %v2931 = vsub.f32 %v2803, %v2913
    %v2932 = vsub.f32 %v2804, %v2915
    %v2933 = vsub.f32 %v2805, %v2917
    %v2934 = vsel %vm2598, %v2918, 0.0
    %v2935 = vsel %vm2599, %v2919, 0.0
    %v2936 = vsel %vm2600, %v2920, 0.0
    %v2937 = vsel %vm2601, %v2921, 0.0
    %v2938 = vsel %vm2602, %v2922, 0.0
    %v2939 = vsel %vm2603, %v2923, 0.0
    %v2940 = vsel %vm2604, %v2924, 0.0
    %v2941 = vsel %vm2605, %v2925, 0.0
    %v2942 = vsel %vm2606, %v2926, 0.0
    %v2943 = vsel %vm2607, %v2927, 0.0
    %v2944 = vsel %vm2608, %v2928, 0.0
    %v2945 = vsel %vm2609, %v2929, 0.0
    %v2946 = vsel %vm2610, %v2930, 0.0
    %v2947 = vsel %vm2611, %v2931, 0.0
    %v2948 = vsel %vm2612, %v2932, 0.0
    %v2949 = vsel %vm2613, %v2933, 0.0
    %v2950 = vadd.f32 %v2758, %v2759
    %v2951 = vadd.f32 %v2950, %v2760
    %v2952 = vadd.f32 %v2951, %v2761
    %v2953 = vadd.f32 %v2952, %v2762
    %v2954 = vadd.f32 %v2953, %v2763
    %v2955 = vadd.f32 %v2954, %v2764
    %v2956 = vadd.f32 %v2955, %v2765
    %v2957 = vadd.f32 %v2956, %v2766
    %v2958 = vadd.f32 %v2957, %v2767
    %v2959 = vadd.f32 %v2958, %v2768
    %v2960 = vadd.f32 %v2959, %v2769
    %v2961 = vadd.f32 %v2960, %v2770
    %v2962 = vadd.f32 %v2961, %v2771
    %v2963 = vadd.f32 %v2962, %v2772
    %v2964 = vadd.f32 %v2963, %v2773
    %v2965 = vrot.slane %v2964, 4
    %v2966 = vadd.f32 %v2964, %v2965
    %v2967 = vrot.slane %v2966, 2
    %v2968 = vadd.f32 %v2966, %v2967
    %v2969 = vrot.slane %v2968, 1
    %v2970 = vadd.f32 %v2968, %v2969
    %v2971 = vsub.f32 0.0, %v2970
    %v2972 = vmul.f32 %v2971, 0.0078125
    %v2973 = vadd.f32 %v2934, %v2935
    %v2974 = vadd.f32 %v2973, %v2936
    %v2975 = vadd.f32 %v2974, %v2937
    %v2976 = vadd.f32 %v2975, %v2938
    %v2977 = vadd.f32 %v2976, %v2939
    %v2978 = vadd.f32 %v2977, %v2940
    %v2979 = vadd.f32 %v2978, %v2941
    %v2980 = vadd.f32 %v2979, %v2942
    %v2981 = vadd.f32 %v2980, %v2943
    %v2982 = vadd.f32 %v2981, %v2944
    %v2983 = vadd.f32 %v2982, %v2945
    %v2984 = vadd.f32 %v2983, %v2946
    %v2985 = vadd.f32 %v2984, %v2947
    %v2986 = vadd.f32 %v2985, %v2948
    %v2987 = vadd.f32 %v2986, %v2949
    %v2988 = vrot.slane %v2987, 4
    %v2989 = vadd.f32 %v2987, %v2988
    %v2990 = vrot.slane %v2989, 2
    %v2991 = vadd.f32 %v2989, %v2990
    %v2992 = vrot.slane %v2991, 1
    %v2993 = vadd.f32 %v2991, %v2992
    %v2994 = vsub.f32 0.0, %v2993
    %v2995 = vmul.f32 %v2994, 0.0078125
    %v2996 = vadd.f32 %v2972, %v2995
    %v2997 = vpack.c.bf16 %v1929, %v1928
    %v2998 = vpack.c.bf16 %v1931, %v1930
    %v2999 = vpack.c.bf16 %v1933, %v1932
    %v3000 = vpack.c.bf16 %v1935, %v1934
    %v3005 = vunpack.c.l.b16 %v2997
    %v3006 = vunpack.c.h.b16 %v2997
    %v3007 = vunpack.c.l.b16 %v2998
    %v3008 = vunpack.c.h.b16 %v2998
    %v3009 = vunpack.c.l.b16 %v2999
    %v3010 = vunpack.c.h.b16 %v2999
    %v3011 = vunpack.c.l.b16 %v3000
    %v3012 = vunpack.c.h.b16 %v3000
    %v3013 = vpack.c.b16 %v3005, %v3005
    %v3014 = vpack.c.b16 %v3006, %v3006
    %v3015 = vpack.c.b16 %v3007, %v3007
    %v3016 = vpack.c.b16 %v3008, %v3008
    %v3017 = vpack.c.b16 %v3009, %v3009
    %v3018 = vpack.c.b16 %v3010, %v3010
    %v3019 = vpack.c.b16 %v3011, %v3011
    %v3020 = vpack.c.b16 %v3012, %v3012
    %3029 = vst [vmem:[%s12] sm:$0xf] %v3013
    %3030 = vst [vmem:[%s12 + $0x4] sm:$0xf] %v3014
    %3031 = vst [vmem:[%s12 + $0x8] sm:$0xf] %v3015
    %3032 = vst [vmem:[%s12 + $0xc] sm:$0xf] %v3016
    %3033 = vst [vmem:[%s12 + $0x10] sm:$0xf] %v3017
    %3034 = vst [vmem:[%s12 + $0x14] sm:$0xf] %v3018
    %3035 = vst [vmem:[%s12 + $0x18] sm:$0xf] %v3019
    %3036 = vst [vmem:[%s12 + $0x1c] sm:$0xf] %v3020
    %3037 = vst [vmem:[#allocation2] sm:$0x1] %v2996
    // Predicated region
    $region50: #{net_forward.1} parent=1 // pred_check
      _
    $region51: #{net_forward.1} parent=1 // pred_check_branch
      %3039 = sbr.rel (0) target = $region53
    $region52: #{net_forward.1} parent=1 // pred_region
      _
    $region53: #{net_forward.1} parent=1 // pred_fallthru
      _
    // Predicated region
    $region54: #{net_forward.1} parent=1 // pred_check
      _
    $region55: #{net_forward.1} parent=1 // pred_check_branch
      %3041 = sbr.rel (0) target = $region57
    $region56: #{net_forward.1} parent=1 // pred_region
      %s3043 = ssub.s32 16, 16
      %3044 = vsyncadd [#allocation3], %s3043
      %s3046 = sshll.u32 [#allocation2], 4
      %s3047 = int_to_ptr.vmem [resolvable:$true] %s3046
      %3049 = dma.vmem_to_hbm [thread:$0]  %s3047, 16, %s13, [#allocation3]
    $region57: #{net_forward.1} parent=1 // pred_fallthru
      _
    // Predicated region
    $region58: #{net_forward.1} parent=1 // pred_check
      _
    $region59: #{net_forward.1} parent=1 // pred_check_branch
      %3051 = sbr.rel (0) target = $region61
    $region60: #{net_forward.1} parent=1 // pred_region
      _
    $region61: #{net_forward.1} parent=1 // pred_fallthru
      _
    // Predicated region
    $region62: #{net_forward.1} parent=1 // pred_check
      _
    $region63: #{net_forward.1} parent=1 // pred_check_branch
      %3053 = sbr.rel (0) target = $region65
    $region64: #{net_forward.1} parent=1 // pred_region
      %3054 = dma.done [#allocation3], 16
    $region65: #{net_forward.1} parent=1 // pred_fallthru
      _
    %3055 = vsyncpa [#allocation3], 1

</llo_original>
